<compile_context>
chip_gen: v7x
topology: tpu7x:2x2x1
jax: 0.10.0
libtpu: 0.0.40
codegen_flags: <defaults>
</compile_context>

<pallas_src>
import jax
import jax.numpy as jnp
from jax.experimental import pallas as pl
from jax.experimental.pallas import tpu as pltpu

R = 66                       # reduction axis (axis=0 in the PyTorch module)
C0, C1, C2 = 43, 10, 10
FLAT = C0 * C1 * C2          # 4300 (flattened trailing dims -> lane axis)

TILE_N = 2176                # 17 * 128 lanes per grid step (2 steps cover 4300)
GRID_N = pl.cdiv(FLAT, TILE_N)   # 2
LANE_CHUNK = 512             # inner lane chunk: 4 vregs per 8-row slab

R_TILE = 8                   # sublane group size for the reduction accumulator
R_FULL = (R // R_TILE) * R_TILE  # 64 (rows 64,65 are the tail)


def _abs_sum_gelu_kernel(x_ref, w_ref, o_ref):
    # x_ref: (1, TILE_N)  -- the (43,10,10) input, broadcast over the 66 rows
    # w_ref: (R, TILE_N)  -- weight slab (already in VMEM via BlockSpec DMA)
    # o_ref: (1, TILE_N)
    #
    # The last grid step overhangs 4300 by 52 lanes: those pad lanes hold
    # undefined data (abs/tanh may transiently produce NaN/Inf there), but the
    # output store is masked by Pallas, so results are unaffected.
    c0 = 0
    while c0 < TILE_N:                       # static Python loop -> static slices
        cw = min(LANE_CHUNK, TILE_N - c0)

        x = x_ref[:, c0:c0 + cw].astype(jnp.float32)       # (1, cw)
        xb = jnp.broadcast_to(x, (R_TILE, cw))              # hoisted sublane bcast

        # acc(8, cw) accumulates |x - w| over 8-row sublane groups (rows 0..63).
        acc = jnp.abs(xb - w_ref[0:R_TILE, c0:c0 + cw].astype(jnp.float32))
        for g in range(1, R // R_TILE):                      # statically unrolled
            w_blk = w_ref[g * R_TILE:(g + 1) * R_TILE, c0:c0 + cw].astype(jnp.float32)
            acc = acc + jnp.abs(xb - w_blk)

        v2 = jnp.sum(acc, axis=0, keepdims=True)             # one 8->1 XLU reduce
        # 2-row tail folded as two (1, cw) VPU adds (no extra XLU pass).
        v2 = v2 + jnp.abs(x - w_ref[R_FULL:R_FULL + 1, c0:c0 + cw].astype(jnp.float32))
        v2 = v2 + jnp.abs(x - w_ref[R_FULL + 1:R_FULL + 2, c0:c0 + cw].astype(jnp.float32))

        # tanh-GELU-style elementwise chain (VPU + EUP tanh).
        v3 = v2 * 0.5
        v7 = v2 + (v2 * v2 * v2) * 0.044715
        v9 = jnp.tanh(v7 * 0.7978845608028654)
        o_ref[:, c0:c0 + cw] = v3 * (v9 + 1.0)

        c0 += cw


def model_forward_flat(x_flat, w_flat):
    """x_flat: (1, 4300) f32; w_flat: (66, 4300). Returns (1, 4300) f32."""
    return pl.pallas_call(
        _abs_sum_gelu_kernel,
        out_shape=jax.ShapeDtypeStruct((1, FLAT), jnp.float32),
        grid_spec=pltpu.PrefetchScalarGridSpec(
            num_scalar_prefetch=0,
            grid=(GRID_N,),
            in_specs=[
                pl.BlockSpec((1, TILE_N), lambda j: (0, j)),
                pl.BlockSpec((R, TILE_N), lambda j: (0, j)),
            ],
            out_specs=pl.BlockSpec((1, TILE_N), lambda j: (0, j)),
        ),
        compiler_params=pltpu.CompilerParams(
            dimension_semantics=("parallel",),
        ),
    )(x_flat, w_flat)


def model_forward(x1, weight):
    """Convenience wrapper matching the PyTorch module signature.

    NOTE: on TPU tiled layouts the 4D->2D flattens below are relayout copies;
    for a hot path, store the weight flat (66, 4300) upstream and call
    model_forward_flat directly (as done in __main__)."""
    x = jnp.broadcast_to(x1, (C0, C1, C2)).reshape(1, FLAT)
    w = weight.reshape(R, FLAT)
    return model_forward_flat(x, w).reshape(C0, C1, C2)


def reference_forward(x1, weight):
    v1 = jnp.abs(x1 - weight)
    v2 = jnp.sum(v1, axis=0)
    v3 = v2 * 0.5
    v4 = v2 * v2
    v5 = v4 * v2
    v6 = v5 * 0.044715
    v7 = v2 + v6
    v8 = v7 * 0.7978845608028654
    v9 = jnp.tanh(v8)
    v10 = v9 + 1.0
    return v3 * v10


if __name__ == "__main__":
    key = jax.random.PRNGKey(0)
    kx, kw = jax.random.split(key)
    # NOTE: the original repro used x1 of shape (5,5,5,5), which is NOT
    # broadcast-compatible with the (66,43,10,10) weight (it is a jit_fail
    # repro).  We use a genuinely-broadcastable (43,10,10) input, matching
    # PyTorch trailing-dim broadcasting against the weight.
    x1 = jax.random.normal(kx, (C0, C1, C2), dtype=jnp.float32)
    # Weight stored flat upstream (per perf review) so the kernel reads it
    # directly with no per-call 4D->2D relayout copy.
    weight_flat = jax.random.normal(kw, (R, FLAT), dtype=jnp.float32)

    out_flat = model_forward_flat(x1.reshape(1, FLAT), weight_flat)
    jax.block_until_ready(out_flat)

    ref = reference_forward(x1, weight_flat.reshape(R, C0, C1, C2))
    out = out_flat.reshape(C0, C1, C2)
    assert out.shape == (C0, C1, C2)
    assert jnp.allclose(out, ref, atol=1e-4, rtol=1e-4)
    print("KERNEL_OK")
</pallas_src>

<mosaic_0001>
module attributes {stable_mosaic.version = 11 : i64} {
  func.func @_abs_sum_gelu_kernel(%arg0: i32, %arg1: memref<1x2176xf32, #tpu.memory_space<vmem>>, %arg2: memref<66x2176xf32, #tpu.memory_space<vmem>>, %arg3: memref<1x2176xf32, #tpu.memory_space<vmem>>) attributes {dimension_semantics = [#tpu.dimension_semantics<parallel>], iteration_bounds = array<i64: 2>, scalar_prefetch = 0 : i64, scratch_operands = 0 : i64, tpu.core_type = #tpu.core_type<tc>, window_params = [{transform_indices = @transform_0, window_bounds = array<i64: 1, 2176>}, {transform_indices = @transform_1, window_bounds = array<i64: 66, 2176>}, {transform_indices = @transform_2, window_bounds = array<i64: 1, 2176>}]} {
    %c0 = arith.constant 0 : index
    %c0_0 = arith.constant 0 : index
    %0 = vector.load %arg1[%c0, %c0_0] : memref<1x2176xf32, #tpu.memory_space<vmem>>, vector<1x512xf32>
    %1 = vector.shape_cast %0 : vector<1x512xf32> to vector<1x512xf32>
    %2 = vector.broadcast %1 : vector<1x512xf32> to vector<8x512xf32>
    %c0_1 = arith.constant 0 : index
    %c0_2 = arith.constant 0 : index
    %3 = vector.load %arg2[%c0_1, %c0_2] : memref<66x2176xf32, #tpu.memory_space<vmem>>, vector<8x512xf32>
    %4 = arith.subf %2, %3 : vector<8x512xf32>
    %5 = math.absf %4 : vector<8x512xf32>
    %c8 = arith.constant 8 : index
    %c0_3 = arith.constant 0 : index
    %6 = vector.load %arg2[%c8, %c0_3] : memref<66x2176xf32, #tpu.memory_space<vmem>>, vector<8x512xf32>
    %7 = arith.subf %2, %6 : vector<8x512xf32>
    %8 = math.absf %7 : vector<8x512xf32>
    %9 = arith.addf %5, %8 : vector<8x512xf32>
    %c16 = arith.constant 16 : index
    %c0_4 = arith.constant 0 : index
    %10 = vector.load %arg2[%c16, %c0_4] : memref<66x2176xf32, #tpu.memory_space<vmem>>, vector<8x512xf32>
    %11 = arith.subf %2, %10 : vector<8x512xf32>
    %12 = math.absf %11 : vector<8x512xf32>
    %13 = arith.addf %9, %12 : vector<8x512xf32>
    %c24 = arith.constant 24 : index
    %c0_5 = arith.constant 0 : index
    %14 = vector.load %arg2[%c24, %c0_5] : memref<66x2176xf32, #tpu.memory_space<vmem>>, vector<8x512xf32>
    %15 = arith.subf %2, %14 : vector<8x512xf32>
    %16 = math.absf %15 : vector<8x512xf32>
    %17 = arith.addf %13, %16 : vector<8x512xf32>
    %c32 = arith.constant 32 : index
    %c0_6 = arith.constant 0 : index
    %18 = vector.load %arg2[%c32, %c0_6] : memref<66x2176xf32, #tpu.memory_space<vmem>>, vector<8x512xf32>
    %19 = arith.subf %2, %18 : vector<8x512xf32>
    %20 = math.absf %19 : vector<8x512xf32>
    %21 = arith.addf %17, %20 : vector<8x512xf32>
    %c40 = arith.constant 40 : index
    %c0_7 = arith.constant 0 : index
    %22 = vector.load %arg2[%c40, %c0_7] : memref<66x2176xf32, #tpu.memory_space<vmem>>, vector<8x512xf32>
    %23 = arith.subf %2, %22 : vector<8x512xf32>
    %24 = math.absf %23 : vector<8x512xf32>
    %25 = arith.addf %21, %24 : vector<8x512xf32>
    %c48 = arith.constant 48 : index
    %c0_8 = arith.constant 0 : index
    %26 = vector.load %arg2[%c48, %c0_8] : memref<66x2176xf32, #tpu.memory_space<vmem>>, vector<8x512xf32>
    %27 = arith.subf %2, %26 : vector<8x512xf32>
    %28 = math.absf %27 : vector<8x512xf32>
    %29 = arith.addf %25, %28 : vector<8x512xf32>
    %c56 = arith.constant 56 : index
    %c0_9 = arith.constant 0 : index
    %30 = vector.load %arg2[%c56, %c0_9] : memref<66x2176xf32, #tpu.memory_space<vmem>>, vector<8x512xf32>
    %31 = arith.subf %2, %30 : vector<8x512xf32>
    %32 = math.absf %31 : vector<8x512xf32>
    %33 = arith.addf %29, %32 : vector<8x512xf32>
    %cst = arith.constant dense<0.000000e+00> : vector<512xf32>
    %34 = vector.multi_reduction <add>, %33, %cst [0] : vector<8x512xf32> to vector<512xf32>
    %35 = vector.shape_cast %34 : vector<512xf32> to vector<1x512xf32>
    %c64 = arith.constant 64 : index
    %c0_10 = arith.constant 0 : index
    %36 = vector.load %arg2[%c64, %c0_10] : memref<66x2176xf32, #tpu.memory_space<vmem>>, vector<1x512xf32>
    %37 = arith.subf %0, %36 : vector<1x512xf32>
    %38 = math.absf %37 : vector<1x512xf32>
    %39 = arith.addf %35, %38 : vector<1x512xf32>
    %c65 = arith.constant 65 : index
    %c0_11 = arith.constant 0 : index
    %40 = vector.load %arg2[%c65, %c0_11] : memref<66x2176xf32, #tpu.memory_space<vmem>>, vector<1x512xf32>
    %41 = arith.subf %0, %40 : vector<1x512xf32>
    %42 = math.absf %41 : vector<1x512xf32>
    %43 = arith.addf %39, %42 : vector<1x512xf32>
    %cst_12 = arith.constant 5.000000e-01 : f32
    %44 = vector.broadcast %cst_12 : f32 to vector<1x512xf32>
    %45 = arith.mulf %43, %44 : vector<1x512xf32>
    %46 = arith.mulf %43, %43 : vector<1x512xf32>
    %47 = arith.mulf %46, %43 : vector<1x512xf32>
    %cst_13 = arith.constant 4.471500e-02 : f32
    %48 = vector.broadcast %cst_13 : f32 to vector<1x512xf32>
    %49 = arith.mulf %47, %48 : vector<1x512xf32>
    %50 = arith.addf %43, %49 : vector<1x512xf32>
    %cst_14 = arith.constant 0.797884583 : f32
    %51 = vector.broadcast %cst_14 : f32 to vector<1x512xf32>
    %52 = arith.mulf %50, %51 : vector<1x512xf32>
    %53 = math.tanh %52 : vector<1x512xf32>
    %cst_15 = arith.constant 1.000000e+00 : f32
    %54 = vector.broadcast %cst_15 : f32 to vector<1x512xf32>
    %55 = arith.addf %53, %54 : vector<1x512xf32>
    %56 = arith.mulf %45, %55 : vector<1x512xf32>
    %c0_16 = arith.constant 0 : index
    %c0_17 = arith.constant 0 : index
    %57 = vector.load %arg3[%c0_16, %c0_17] : memref<1x2176xf32, #tpu.memory_space<vmem>>, vector<1x512xf32>
    tpu.vector_store %arg3[%c0_16, %c0_17], %56 {strides = array<i32>} : memref<1x2176xf32, #tpu.memory_space<vmem>>, vector<1x512xf32>,
    %c0_18 = arith.constant 0 : index
    %c512 = arith.constant 512 : index
    %58 = vector.load %arg1[%c0_18, %c512] : memref<1x2176xf32, #tpu.memory_space<vmem>>, vector<1x512xf32>
    %59 = vector.shape_cast %58 : vector<1x512xf32> to vector<1x512xf32>
    %60 = vector.broadcast %59 : vector<1x512xf32> to vector<8x512xf32>
    %c0_19 = arith.constant 0 : index
    %c512_20 = arith.constant 512 : index
    %61 = vector.load %arg2[%c0_19, %c512_20] : memref<66x2176xf32, #tpu.memory_space<vmem>>, vector<8x512xf32>
    %62 = arith.subf %60, %61 : vector<8x512xf32>
    %63 = math.absf %62 : vector<8x512xf32>
    %c8_21 = arith.constant 8 : index
    %c512_22 = arith.constant 512 : index
    %64 = vector.load %arg2[%c8_21, %c512_22] : memref<66x2176xf32, #tpu.memory_space<vmem>>, vector<8x512xf32>
    %65 = arith.subf %60, %64 : vector<8x512xf32>
    %66 = math.absf %65 : vector<8x512xf32>
    %67 = arith.addf %63, %66 : vector<8x512xf32>
    %c16_23 = arith.constant 16 : index
    %c512_24 = arith.constant 512 : index
    %68 = vector.load %arg2[%c16_23, %c512_24] : memref<66x2176xf32, #tpu.memory_space<vmem>>, vector<8x512xf32>
    %69 = arith.subf %60, %68 : vector<8x512xf32>
    %70 = math.absf %69 : vector<8x512xf32>
    %71 = arith.addf %67, %70 : vector<8x512xf32>
    %c24_25 = arith.constant 24 : index
    %c512_26 = arith.constant 512 : index
    %72 = vector.load %arg2[%c24_25, %c512_26] : memref<66x2176xf32, #tpu.memory_space<vmem>>, vector<8x512xf32>
    %73 = arith.subf %60, %72 : vector<8x512xf32>
    %74 = math.absf %73 : vector<8x512xf32>
    %75 = arith.addf %71, %74 : vector<8x512xf32>
    %c32_27 = arith.constant 32 : index
    %c512_28 = arith.constant 512 : index
    %76 = vector.load %arg2[%c32_27, %c512_28] : memref<66x2176xf32, #tpu.memory_space<vmem>>, vector<8x512xf32>
    %77 = arith.subf %60, %76 : vector<8x512xf32>
    %78 = math.absf %77 : vector<8x512xf32>
    %79 = arith.addf %75, %78 : vector<8x512xf32>
    %c40_29 = arith.constant 40 : index
    %c512_30 = arith.constant 512 : index
    %80 = vector.load %arg2[%c40_29, %c512_30] : memref<66x2176xf32, #tpu.memory_space<vmem>>, vector<8x512xf32>
    %81 = arith.subf %60, %80 : vector<8x512xf32>
    %82 = math.absf %81 : vector<8x512xf32>
    %83 = arith.addf %79, %82 : vector<8x512xf32>
    %c48_31 = arith.constant 48 : index
    %c512_32 = arith.constant 512 : index
    %84 = vector.load %arg2[%c48_31, %c512_32] : memref<66x2176xf32, #tpu.memory_space<vmem>>, vector<8x512xf32>
    %85 = arith.subf %60, %84 : vector<8x512xf32>
    %86 = math.absf %85 : vector<8x512xf32>
    %87 = arith.addf %83, %86 : vector<8x512xf32>
    %c56_33 = arith.constant 56 : index
    %c512_34 = arith.constant 512 : index
    %88 = vector.load %arg2[%c56_33, %c512_34] : memref<66x2176xf32, #tpu.memory_space<vmem>>, vector<8x512xf32>
    %89 = arith.subf %60, %88 : vector<8x512xf32>
    %90 = math.absf %89 : vector<8x512xf32>
    %91 = arith.addf %87, %90 : vector<8x512xf32>
    %cst_35 = arith.constant dense<0.000000e+00> : vector<512xf32>
    %92 = vector.multi_reduction <add>, %91, %cst_35 [0] : vector<8x512xf32> to vector<512xf32>
    %93 = vector.shape_cast %92 : vector<512xf32> to vector<1x512xf32>
    %c64_36 = arith.constant 64 : index
    %c512_37 = arith.constant 512 : index
    %94 = vector.load %arg2[%c64_36, %c512_37] : memref<66x2176xf32, #tpu.memory_space<vmem>>, vector<1x512xf32>
    %95 = arith.subf %58, %94 : vector<1x512xf32>
    %96 = math.absf %95 : vector<1x512xf32>
    %97 = arith.addf %93, %96 : vector<1x512xf32>
    %c65_38 = arith.constant 65 : index
    %c512_39 = arith.constant 512 : index
    %98 = vector.load %arg2[%c65_38, %c512_39] : memref<66x2176xf32, #tpu.memory_space<vmem>>, vector<1x512xf32>
    %99 = arith.subf %58, %98 : vector<1x512xf32>
    %100 = math.absf %99 : vector<1x512xf32>
    %101 = arith.addf %97, %100 : vector<1x512xf32>
    %cst_40 = arith.constant 5.000000e-01 : f32
    %102 = vector.broadcast %cst_40 : f32 to vector<1x512xf32>
    %103 = arith.mulf %101, %102 : vector<1x512xf32>
    %104 = arith.mulf %101, %101 : vector<1x512xf32>
    %105 = arith.mulf %104, %101 : vector<1x512xf32>
    %cst_41 = arith.constant 4.471500e-02 : f32
    %106 = vector.broadcast %cst_41 : f32 to vector<1x512xf32>
    %107 = arith.mulf %105, %106 : vector<1x512xf32>
    %108 = arith.addf %101, %107 : vector<1x512xf32>
    %cst_42 = arith.constant 0.797884583 : f32
    %109 = vector.broadcast %cst_42 : f32 to vector<1x512xf32>
    %110 = arith.mulf %108, %109 : vector<1x512xf32>
    %111 = math.tanh %110 : vector<1x512xf32>
    %cst_43 = arith.constant 1.000000e+00 : f32
    %112 = vector.broadcast %cst_43 : f32 to vector<1x512xf32>
    %113 = arith.addf %111, %112 : vector<1x512xf32>
    %114 = arith.mulf %103, %113 : vector<1x512xf32>
    %c0_44 = arith.constant 0 : index
    %c512_45 = arith.constant 512 : index
    %115 = vector.load %arg3[%c0_44, %c512_45] : memref<1x2176xf32, #tpu.memory_space<vmem>>, vector<1x512xf32>
    tpu.vector_store %arg3[%c0_44, %c512_45], %114 {strides = array<i32>} : memref<1x2176xf32, #tpu.memory_space<vmem>>, vector<1x512xf32>,
    %c0_46 = arith.constant 0 : index
    %c1024 = arith.constant 1024 : index
    %116 = vector.load %arg1[%c0_46, %c1024] : memref<1x2176xf32, #tpu.memory_space<vmem>>, vector<1x512xf32>
    %117 = vector.shape_cast %116 : vector<1x512xf32> to vector<1x512xf32>
    %118 = vector.broadcast %117 : vector<1x512xf32> to vector<8x512xf32>
    %c0_47 = arith.constant 0 : index
    %c1024_48 = arith.constant 1024 : index
    %119 = vector.load %arg2[%c0_47, %c1024_48] : memref<66x2176xf32, #tpu.memory_space<vmem>>, vector<8x512xf32>
    %120 = arith.subf %118, %119 : vector<8x512xf32>
    %121 = math.absf %120 : vector<8x512xf32>
    %c8_49 = arith.constant 8 : index
    %c1024_50 = arith.constant 1024 : index
    %122 = vector.load %arg2[%c8_49, %c1024_50] : memref<66x2176xf32, #tpu.memory_space<vmem>>, vector<8x512xf32>
    %123 = arith.subf %118, %122 : vector<8x512xf32>
    %124 = math.absf %123 : vector<8x512xf32>
    %125 = arith.addf %121, %124 : vector<8x512xf32>
    %c16_51 = arith.constant 16 : index
    %c1024_52 = arith.constant 1024 : index
    %126 = vector.load %arg2[%c16_51, %c1024_52] : memref<66x2176xf32, #tpu.memory_space<vmem>>, vector<8x512xf32>
    %127 = arith.subf %118, %126 : vector<8x512xf32>
    %128 = math.absf %127 : vector<8x512xf32>
    %129 = arith.addf %125, %128 : vector<8x512xf32>
    %c24_53 = arith.constant 24 : index
    %c1024_54 = arith.constant 1024 : index
    %130 = vector.load %arg2[%c24_53, %c1024_54] : memref<66x2176xf32, #tpu.memory_space<vmem>>, vector<8x512xf32>
    %131 = arith.subf %118, %130 : vector<8x512xf32>
    %132 = math.absf %131 : vector<8x512xf32>
    %133 = arith.addf %129, %132 : vector<8x512xf32>
    %c32_55 = arith.constant 32 : index
    %c1024_56 = arith.constant 1024 : index
    %134 = vector.load %arg2[%c32_55, %c1024_56] : memref<66x2176xf32, #tpu.memory_space<vmem>>, vector<8x512xf32>
    %135 = arith.subf %118, %134 : vector<8x512xf32>
    %136 = math.absf %135 : vector<8x512xf32>
    %137 = arith.addf %133, %136 : vector<8x512xf32>
    %c40_57 = arith.constant 40 : index
    %c1024_58 = arith.constant 1024 : index
    %138 = vector.load %arg2[%c40_57, %c1024_58] : memref<66x2176xf32, #tpu.memory_space<vmem>>, vector<8x512xf32>
    %139 = arith.subf %118, %138 : vector<8x512xf32>
    %140 = math.absf %139 : vector<8x512xf32>
    %141 = arith.addf %137, %140 : vector<8x512xf32>
    %c48_59 = arith.constant 48 : index
    %c1024_60 = arith.constant 1024 : index
    %142 = vector.load %arg2[%c48_59, %c1024_60] : memref<66x2176xf32, #tpu.memory_space<vmem>>, vector<8x512xf32>
    %143 = arith.subf %118, %142 : vector<8x512xf32>
    %144 = math.absf %143 : vector<8x512xf32>
    %145 = arith.addf %141, %144 : vector<8x512xf32>
    %c56_61 = arith.constant 56 : index
    %c1024_62 = arith.constant 1024 : index
    %146 = vector.load %arg2[%c56_61, %c1024_62] : memref<66x2176xf32, #tpu.memory_space<vmem>>, vector<8x512xf32>
    %147 = arith.subf %118, %146 : vector<8x512xf32>
    %148 = math.absf %147 : vector<8x512xf32>
    %149 = arith.addf %145, %148 : vector<8x512xf32>
    %cst_63 = arith.constant dense<0.000000e+00> : vector<512xf32>
    %150 = vector.multi_reduction <add>, %149, %cst_63 [0] : vector<8x512xf32> to vector<512xf32>
    %151 = vector.shape_cast %150 : vector<512xf32> to vector<1x512xf32>
    %c64_64 = arith.constant 64 : index
    %c1024_65 = arith.constant 1024 : index
    %152 = vector.load %arg2[%c64_64, %c1024_65] : memref<66x2176xf32, #tpu.memory_space<vmem>>, vector<1x512xf32>
    %153 = arith.subf %116, %152 : vector<1x512xf32>
    %154 = math.absf %153 : vector<1x512xf32>
    %155 = arith.addf %151, %154 : vector<1x512xf32>
    %c65_66 = arith.constant 65 : index
    %c1024_67 = arith.constant 1024 : index
    %156 = vector.load %arg2[%c65_66, %c1024_67] : memref<66x2176xf32, #tpu.memory_space<vmem>>, vector<1x512xf32>
    %157 = arith.subf %116, %156 : vector<1x512xf32>
    %158 = math.absf %157 : vector<1x512xf32>
    %159 = arith.addf %155, %158 : vector<1x512xf32>
    %cst_68 = arith.constant 5.000000e-01 : f32
    %160 = vector.broadcast %cst_68 : f32 to vector<1x512xf32>
    %161 = arith.mulf %159, %160 : vector<1x512xf32>
    %162 = arith.mulf %159, %159 : vector<1x512xf32>
    %163 = arith.mulf %162, %159 : vector<1x512xf32>
    %cst_69 = arith.constant 4.471500e-02 : f32
    %164 = vector.broadcast %cst_69 : f32 to vector<1x512xf32>
    %165 = arith.mulf %163, %164 : vector<1x512xf32>
    %166 = arith.addf %159, %165 : vector<1x512xf32>
    %cst_70 = arith.constant 0.797884583 : f32
    %167 = vector.broadcast %cst_70 : f32 to vector<1x512xf32>
    %168 = arith.mulf %166, %167 : vector<1x512xf32>
    %169 = math.tanh %168 : vector<1x512xf32>
    %cst_71 = arith.constant 1.000000e+00 : f32
    %170 = vector.broadcast %cst_71 : f32 to vector<1x512xf32>
    %171 = arith.addf %169, %170 : vector<1x512xf32>
    %172 = arith.mulf %161, %171 : vector<1x512xf32>
    %c0_72 = arith.constant 0 : index
    %c1024_73 = arith.constant 1024 : index
    %173 = vector.load %arg3[%c0_72, %c1024_73] : memref<1x2176xf32, #tpu.memory_space<vmem>>, vector<1x512xf32>
    tpu.vector_store %arg3[%c0_72, %c1024_73], %172 {strides = array<i32>} : memref<1x2176xf32, #tpu.memory_space<vmem>>, vector<1x512xf32>,
    %c0_74 = arith.constant 0 : index
    %c1536 = arith.constant 1536 : index
    %174 = vector.load %arg1[%c0_74, %c1536] : memref<1x2176xf32, #tpu.memory_space<vmem>>, vector<1x512xf32>
    %175 = vector.shape_cast %174 : vector<1x512xf32> to vector<1x512xf32>
    %176 = vector.broadcast %175 : vector<1x512xf32> to vector<8x512xf32>
    %c0_75 = arith.constant 0 : index
    %c1536_76 = arith.constant 1536 : index
    %177 = vector.load %arg2[%c0_75, %c1536_76] : memref<66x2176xf32, #tpu.memory_space<vmem>>, vector<8x512xf32>
    %178 = arith.subf %176, %177 : vector<8x512xf32>
    %179 = math.absf %178 : vector<8x512xf32>
    %c8_77 = arith.constant 8 : index
    %c1536_78 = arith.constant 1536 : index
    %180 = vector.load %arg2[%c8_77, %c1536_78] : memref<66x2176xf32, #tpu.memory_space<vmem>>, vector<8x512xf32>
    %181 = arith.subf %176, %180 : vector<8x512xf32>
    %182 = math.absf %181 : vector<8x512xf32>
    %183 = arith.addf %179, %182 : vector<8x512xf32>
    %c16_79 = arith.constant 16 : index
    %c1536_80 = arith.constant 1536 : index
    %184 = vector.load %arg2[%c16_79, %c1536_80] : memref<66x2176xf32, #tpu.memory_space<vmem>>, vector<8x512xf32>
    %185 = arith.subf %176, %184 : vector<8x512xf32>
    %186 = math.absf %185 : vector<8x512xf32>
    %187 = arith.addf %183, %186 : vector<8x512xf32>
    %c24_81 = arith.constant 24 : index
    %c1536_82 = arith.constant 1536 : index
    %188 = vector.load %arg2[%c24_81, %c1536_82] : memref<66x2176xf32, #tpu.memory_space<vmem>>, vector<8x512xf32>
    %189 = arith.subf %176, %188 : vector<8x512xf32>
    %190 = math.absf %189 : vector<8x512xf32>
    %191 = arith.addf %187, %190 : vector<8x512xf32>
    %c32_83 = arith.constant 32 : index
    %c1536_84 = arith.constant 1536 : index
    %192 = vector.load %arg2[%c32_83, %c1536_84] : memref<66x2176xf32, #tpu.memory_space<vmem>>, vector<8x512xf32>
    %193 = arith.subf %176, %192 : vector<8x512xf32>
    %194 = math.absf %193 : vector<8x512xf32>
    %195 = arith.addf %191, %194 : vector<8x512xf32>
    %c40_85 = arith.constant 40 : index
    %c1536_86 = arith.constant 1536 : index
    %196 = vector.load %arg2[%c40_85, %c1536_86] : memref<66x2176xf32, #tpu.memory_space<vmem>>, vector<8x512xf32>
    %197 = arith.subf %176, %196 : vector<8x512xf32>
    %198 = math.absf %197 : vector<8x512xf32>
    %199 = arith.addf %195, %198 : vector<8x512xf32>
    %c48_87 = arith.constant 48 : index
    %c1536_88 = arith.constant 1536 : index
    %200 = vector.load %arg2[%c48_87, %c1536_88] : memref<66x2176xf32, #tpu.memory_space<vmem>>, vector<8x512xf32>
    %201 = arith.subf %176, %200 : vector<8x512xf32>
    %202 = math.absf %201 : vector<8x512xf32>
    %203 = arith.addf %199, %202 : vector<8x512xf32>
    %c56_89 = arith.constant 56 : index
    %c1536_90 = arith.constant 1536 : index
    %204 = vector.load %arg2[%c56_89, %c1536_90] : memref<66x2176xf32, #tpu.memory_space<vmem>>, vector<8x512xf32>
    %205 = arith.subf %176, %204 : vector<8x512xf32>
    %206 = math.absf %205 : vector<8x512xf32>
    %207 = arith.addf %203, %206 : vector<8x512xf32>
    %cst_91 = arith.constant dense<0.000000e+00> : vector<512xf32>
    %208 = vector.multi_reduction <add>, %207, %cst_91 [0] : vector<8x512xf32> to vector<512xf32>
    %209 = vector.shape_cast %208 : vector<512xf32> to vector<1x512xf32>
    %c64_92 = arith.constant 64 : index
    %c1536_93 = arith.constant 1536 : index
    %210 = vector.load %arg2[%c64_92, %c1536_93] : memref<66x2176xf32, #tpu.memory_space<vmem>>, vector<1x512xf32>
    %211 = arith.subf %174, %210 : vector<1x512xf32>
    %212 = math.absf %211 : vector<1x512xf32>
    %213 = arith.addf %209, %212 : vector<1x512xf32>
    %c65_94 = arith.constant 65 : index
    %c1536_95 = arith.constant 1536 : index
    %214 = vector.load %arg2[%c65_94, %c1536_95] : memref<66x2176xf32, #tpu.memory_space<vmem>>, vector<1x512xf32>
    %215 = arith.subf %174, %214 : vector<1x512xf32>
    %216 = math.absf %215 : vector<1x512xf32>
    %217 = arith.addf %213, %216 : vector<1x512xf32>
    %cst_96 = arith.constant 5.000000e-01 : f32
    %218 = vector.broadcast %cst_96 : f32 to vector<1x512xf32>
    %219 = arith.mulf %217, %218 : vector<1x512xf32>
    %220 = arith.mulf %217, %217 : vector<1x512xf32>
    %221 = arith.mulf %220, %217 : vector<1x512xf32>
    %cst_97 = arith.constant 4.471500e-02 : f32
    %222 = vector.broadcast %cst_97 : f32 to vector<1x512xf32>
    %223 = arith.mulf %221, %222 : vector<1x512xf32>
    %224 = arith.addf %217, %223 : vector<1x512xf32>
    %cst_98 = arith.constant 0.797884583 : f32
    %225 = vector.broadcast %cst_98 : f32 to vector<1x512xf32>
    %226 = arith.mulf %224, %225 : vector<1x512xf32>
    %227 = math.tanh %226 : vector<1x512xf32>
    %cst_99 = arith.constant 1.000000e+00 : f32
    %228 = vector.broadcast %cst_99 : f32 to vector<1x512xf32>
    %229 = arith.addf %227, %228 : vector<1x512xf32>
    %230 = arith.mulf %219, %229 : vector<1x512xf32>
    %c0_100 = arith.constant 0 : index
    %c1536_101 = arith.constant 1536 : index
    %231 = vector.load %arg3[%c0_100, %c1536_101] : memref<1x2176xf32, #tpu.memory_space<vmem>>, vector<1x512xf32>
    tpu.vector_store %arg3[%c0_100, %c1536_101], %230 {strides = array<i32>} : memref<1x2176xf32, #tpu.memory_space<vmem>>, vector<1x512xf32>,
    %c0_102 = arith.constant 0 : index
    %c2048 = arith.constant 2048 : index
    %232 = vector.load %arg1[%c0_102, %c2048] : memref<1x2176xf32, #tpu.memory_space<vmem>>, vector<1x128xf32>
    %233 = vector.shape_cast %232 : vector<1x128xf32> to vector<1x128xf32>
    %234 = vector.broadcast %233 : vector<1x128xf32> to vector<8x128xf32>
    %c0_103 = arith.constant 0 : index
    %c2048_104 = arith.constant 2048 : index
    %235 = vector.load %arg2[%c0_103, %c2048_104] : memref<66x2176xf32, #tpu.memory_space<vmem>>, vector<8x128xf32>
    %236 = arith.subf %234, %235 : vector<8x128xf32>
    %237 = math.absf %236 : vector<8x128xf32>
    %c8_105 = arith.constant 8 : index
    %c2048_106 = arith.constant 2048 : index
    %238 = vector.load %arg2[%c8_105, %c2048_106] : memref<66x2176xf32, #tpu.memory_space<vmem>>, vector<8x128xf32>
    %239 = arith.subf %234, %238 : vector<8x128xf32>
    %240 = math.absf %239 : vector<8x128xf32>
    %241 = arith.addf %237, %240 : vector<8x128xf32>
    %c16_107 = arith.constant 16 : index
    %c2048_108 = arith.constant 2048 : index
    %242 = vector.load %arg2[%c16_107, %c2048_108] : memref<66x2176xf32, #tpu.memory_space<vmem>>, vector<8x128xf32>
    %243 = arith.subf %234, %242 : vector<8x128xf32>
    %244 = math.absf %243 : vector<8x128xf32>
    %245 = arith.addf %241, %244 : vector<8x128xf32>
    %c24_109 = arith.constant 24 : index
    %c2048_110 = arith.constant 2048 : index
    %246 = vector.load %arg2[%c24_109, %c2048_110] : memref<66x2176xf32, #tpu.memory_space<vmem>>, vector<8x128xf32>
    %247 = arith.subf %234, %246 : vector<8x128xf32>
    %248 = math.absf %247 : vector<8x128xf32>
    %249 = arith.addf %245, %248 : vector<8x128xf32>
    %c32_111 = arith.constant 32 : index
    %c2048_112 = arith.constant 2048 : index
    %250 = vector.load %arg2[%c32_111, %c2048_112] : memref<66x2176xf32, #tpu.memory_space<vmem>>, vector<8x128xf32>
    %251 = arith.subf %234, %250 : vector<8x128xf32>
    %252 = math.absf %251 : vector<8x128xf32>
    %253 = arith.addf %249, %252 : vector<8x128xf32>
    %c40_113 = arith.constant 40 : index
    %c2048_114 = arith.constant 2048 : index
    %254 = vector.load %arg2[%c40_113, %c2048_114] : memref<66x2176xf32, #tpu.memory_space<vmem>>, vector<8x128xf32>
    %255 = arith.subf %234, %254 : vector<8x128xf32>
    %256 = math.absf %255 : vector<8x128xf32>
    %257 = arith.addf %253, %256 : vector<8x128xf32>
    %c48_115 = arith.constant 48 : index
    %c2048_116 = arith.constant 2048 : index
    %258 = vector.load %arg2[%c48_115, %c2048_116] : memref<66x2176xf32, #tpu.memory_space<vmem>>, vector<8x128xf32>
    %259 = arith.subf %234, %258 : vector<8x128xf32>
    %260 = math.absf %259 : vector<8x128xf32>
    %261 = arith.addf %257, %260 : vector<8x128xf32>
    %c56_117 = arith.constant 56 : index
    %c2048_118 = arith.constant 2048 : index
    %262 = vector.load %arg2[%c56_117, %c2048_118] : memref<66x2176xf32, #tpu.memory_space<vmem>>, vector<8x128xf32>
    %263 = arith.subf %234, %262 : vector<8x128xf32>
    %264 = math.absf %263 : vector<8x128xf32>
    %265 = arith.addf %261, %264 : vector<8x128xf32>
    %cst_119 = arith.constant dense<0.000000e+00> : vector<128xf32>
    %266 = vector.multi_reduction <add>, %265, %cst_119 [0] : vector<8x128xf32> to vector<128xf32>
    %267 = vector.shape_cast %266 : vector<128xf32> to vector<1x128xf32>
    %c64_120 = arith.constant 64 : index
    %c2048_121 = arith.constant 2048 : index
    %268 = vector.load %arg2[%c64_120, %c2048_121] : memref<66x2176xf32, #tpu.memory_space<vmem>>, vector<1x128xf32>
    %269 = arith.subf %232, %268 : vector<1x128xf32>
    %270 = math.absf %269 : vector<1x128xf32>
    %271 = arith.addf %267, %270 : vector<1x128xf32>
    %c65_122 = arith.constant 65 : index
    %c2048_123 = arith.constant 2048 : index
    %272 = vector.load %arg2[%c65_122, %c2048_123] : memref<66x2176xf32, #tpu.memory_space<vmem>>, vector<1x128xf32>
    %273 = arith.subf %232, %272 : vector<1x128xf32>
    %274 = math.absf %273 : vector<1x128xf32>
    %275 = arith.addf %271, %274 : vector<1x128xf32>
    %cst_124 = arith.constant 5.000000e-01 : f32
    %276 = vector.broadcast %cst_124 : f32 to vector<1x128xf32>
    %277 = arith.mulf %275, %276 : vector<1x128xf32>
    %278 = arith.mulf %275, %275 : vector<1x128xf32>
    %279 = arith.mulf %278, %275 : vector<1x128xf32>
    %cst_125 = arith.constant 4.471500e-02 : f32
    %280 = vector.broadcast %cst_125 : f32 to vector<1x128xf32>
    %281 = arith.mulf %279, %280 : vector<1x128xf32>
    %282 = arith.addf %275, %281 : vector<1x128xf32>
    %cst_126 = arith.constant 0.797884583 : f32
    %283 = vector.broadcast %cst_126 : f32 to vector<1x128xf32>
    %284 = arith.mulf %282, %283 : vector<1x128xf32>
    %285 = math.tanh %284 : vector<1x128xf32>
    %cst_127 = arith.constant 1.000000e+00 : f32
    %286 = vector.broadcast %cst_127 : f32 to vector<1x128xf32>
    %287 = arith.addf %285, %286 : vector<1x128xf32>
    %288 = arith.mulf %277, %287 : vector<1x128xf32>
    %c0_128 = arith.constant 0 : index
    %c2048_129 = arith.constant 2048 : index
    %289 = vector.load %arg3[%c0_128, %c2048_129] : memref<1x2176xf32, #tpu.memory_space<vmem>>, vector<1x128xf32>
    tpu.vector_store %arg3[%c0_128, %c2048_129], %288 {strides = array<i32>} : memref<1x2176xf32, #tpu.memory_space<vmem>>, vector<1x128xf32>,
    return
  }
  func.func @transform_0(%arg0: i32) -> (i32, i32) {
    %c0_i32 = arith.constant 0 : i32
    %c0_i32_0 = arith.constant 0 : i32
    return %c0_i32, %arg0 : i32, i32
  }
  func.func @transform_1(%arg0: i32) -> (i32, i32) {
    %c0_i32 = arith.constant 0 : i32
    %c0_i32_0 = arith.constant 0 : i32
    return %c0_i32, %arg0 : i32, i32
  }
  func.func @transform_2(%arg0: i32) -> (i32, i32) {
    %c0_i32 = arith.constant 0 : i32
    %c0_i32_0 = arith.constant 0 : i32
    return %c0_i32, %arg0 : i32, i32
  }
}

</mosaic_0001>

<llo_original>
// kernel: tpu_custom_call.1
$region0: #{tpu_custom_call.1}
  #allocation0 [shape = 'u32[]', space=smem, size = 0x4, offset = 0x4, fixed_abs, tag = 'smem constant byte address 0x4 - core index']
  #allocation1 [shape = 'u32[144,128]{1,0:T(1,128)}', space=vmem, size = 0x12000, scoped, tag = 'internal scratch']
  %s0 = inlined_call_operand.hbm [shape: f32[1,4300], index: 0, kind: input, shape index: {}]
  %s1 = inlined_call_operand.hbm [shape: f32[66,4300], index: 1, kind: input, shape index: {}]
  %s2 = inlined_call_operand.hbm [shape: f32[1,4300], index: 2, kind: output, shape index: {}]
  %s3 = sld [smem:[#allocation0]]
  $region49: #{tpu_custom_call.1} parent=0
    _
  %s5 = ssub.s32 1, %s3
  %s6 = scalar_select 0, %s5, %s3
  $region1: #{tpu_custom_call.1} parent=0
    #allocation2 [shape = 'u8[17408]{0}', space=vmem, size = 0x4400, scoped, tag = 'input window, operand 0']
    #allocation3 [shape = 's32[2]{0}', space=sflag, size = 0x8, scoped, tag = 'scoped memory for tpu_custom_call.1']
    #allocation4 [shape = 's32[2]{0}', space=sflag, size = 0x8, scoped, tag = 'scoped memory for tpu_custom_call.1']
    #allocation5 [shape = 'u8[1253376]{0}', space=vmem, size = 0x132000, scoped, tag = 'input window, operand 1']
    #allocation6 [shape = 's32[2]{0}', space=sflag, size = 0x8, scoped, tag = 'scoped memory for tpu_custom_call.1']
    #allocation7 [shape = 'u8[17408]{0}', space=vmem, size = 0x4400, scoped, tag = 'output window, operand 0']
    %7 = vsyncpa [#allocation3], 0
    %s8 = scalar_lea.sflag [#allocation3], 1
    %9 = vsyncpa %s8, 0
    %10 = vsyncpa [#allocation6], 0
    %s11 = scalar_lea.sflag [#allocation6], 1
    %12 = vsyncpa %s11, 0
    %13 = vsyncpa [#allocation4], 0
    %s14 = scalar_lea.sflag [#allocation4], 1
    %15 = vsyncpa %s14, 0
    loop: start=0, step=1, limit=4
    $region2: #{tpu_custom_call.1} parent=1 // loop_pre_header
      _
    $region3: #{tpu_custom_call.1} parent=1 // loop_header
      %s17 = sphi 0, %s21
      %p18 = scmp.ge.s32.totalorder %s17, 4
      %s27 = sphi 0, %s29
      %s30 = sphi 0, %s27
      %s31 = sphi 0, %s30
      %s47 = sphi 0, %s31
      %s53 = sphi 0, %s55
      %s56 = sphi 0, %s53
      %s57 = sphi 0, %s56
      %s73 = sphi 0, %s57
      %s79 = sphi 0, %s81
      %s82 = sphi 0, %s79
      %s83 = sphi 0, %s82
      %s99 = sphi 0, %s83
    $region4: #{tpu_custom_call.1} parent=1 // loop_header_branch
      %20 = sbr.rel (%p18) target = $region8
    $region5: #{tpu_custom_call.1} parent=1 // loop_body
      %s22 = ssub.s32 %s17, 1
      %s23 = ssub.s32 %s17, 2
      %s24 = sadd.s32 %s17, 1
      %s25 = ssub.s32 %s17, %s24
      %p26 = scmp.eq.s32.totalorder %s25, 0
      %s28 = sadd.s32 %s27, 1
      %s29 = scalar_select %p26, %s27, %s28
      %p32 = pneg %p26
      %p33 = scmp.eq.s32.totalorder %s17, 1
      %p34 = por %p32, %p33
      %p35 = scmp.ne.s32.totalorder %s27, %s30
      %p36 = scmp.eq.s32.totalorder %s17, 0
      %p37 = por %p35, %p36
      %p38 = scmp.ne.s32.totalorder %s27, %s30
      %p39 = scmp.eq.s32.totalorder %s22, 1
      %p40 = por %p38, %p39
      %p41 = scmp.ne.s32.totalorder %s30, %s31
      %p42 = scmp.eq.s32.totalorder %s22, 0
      %p43 = por %p41, %p42
      %p44 = scmp.ne.s32.totalorder %s30, %s31
      %p45 = scmp.eq.s32.totalorder %s23, 1
      %p46 = por %p44, %p45
      %p48 = scmp.ne.s32.totalorder %s31, %s47
      %p49 = scmp.eq.s32.totalorder %s23, 0
      %p50 = por %p48, %p49
      %s51 = ssub.s32 %s17, %s24
      %p52 = scmp.eq.s32.totalorder %s51, 0
      %s54 = sadd.s32 %s53, 1
      %s55 = scalar_select %p52, %s53, %s54
      %p58 = pneg %p52
      %p59 = scmp.eq.s32.totalorder %s17, 1
      %p60 = por %p58, %p59
      %p61 = scmp.ne.s32.totalorder %s53, %s56
      %p62 = scmp.eq.s32.totalorder %s17, 0
      %p63 = por %p61, %p62
      %p64 = scmp.ne.s32.totalorder %s53, %s56
      %p65 = scmp.eq.s32.totalorder %s22, 1
      %p66 = por %p64, %p65
      %p67 = scmp.ne.s32.totalorder %s56, %s57
      %p68 = scmp.eq.s32.totalorder %s22, 0
      %p69 = por %p67, %p68
      %p70 = scmp.ne.s32.totalorder %s56, %s57
      %p71 = scmp.eq.s32.totalorder %s23, 1
      %p72 = por %p70, %p71
      %p74 = scmp.ne.s32.totalorder %s57, %s73
      %p75 = scmp.eq.s32.totalorder %s23, 0
      %p76 = por %p74, %p75
      %s77 = ssub.s32 %s17, %s24
      %p78 = scmp.eq.s32.totalorder %s77, 0
      %s80 = sadd.s32 %s79, 1
      %s81 = scalar_select %p78, %s79, %s80
      %p84 = pneg %p78
      %p85 = scmp.eq.s32.totalorder %s17, 1
      %p86 = por %p84, %p85
      %p87 = scmp.ne.s32.totalorder %s79, %s82
      %p88 = scmp.eq.s32.totalorder %s17, 0
      %p89 = por %p87, %p88
      %p90 = scmp.ne.s32.totalorder %s79, %s82
      %p91 = scmp.eq.s32.totalorder %s22, 1
      %p92 = por %p90, %p91
      %p93 = scmp.ne.s32.totalorder %s82, %s83
      %p94 = scmp.eq.s32.totalorder %s22, 0
      %p95 = por %p93, %p94
      %p96 = scmp.ne.s32.totalorder %s82, %s83
      %p97 = scmp.eq.s32.totalorder %s23, 1
      %p98 = por %p96, %p97
      %p100 = scmp.ne.s32.totalorder %s83, %s99
      %p101 = scmp.eq.s32.totalorder %s23, 0
      %p102 = por %p100, %p101
      %p103 = scmp.le.s32.totalorder 1, %s17
      %p104 = scmp.lt.s32.totalorder %s17, 3
      %p105 = pnand %p103, %p104
      %p106 = pneg %p105
      // Predicated region
      $region9: #{tpu_custom_call.1} parent=5 // pred_check
        _
      $region10: #{tpu_custom_call.1} parent=5 // pred_check_branch
        %108 = sbr.rel (%p105) target = $region12
      $region11: #{tpu_custom_call.1} parent=5 // pred_region
        %s109 = ssub.s32 %s17, 1
      $region12: #{tpu_custom_call.1} parent=5 // pred_fallthru
        _
      %p110 = scmp.lt.s32.totalorder %s17, 2
      // Predicated region
      $region13: #{tpu_custom_call.1} parent=5 // pred_check
        %p111 = pneg %p110
      $region14: #{tpu_custom_call.1} parent=5 // pred_check_branch
        %113 = sbr.rel (%p111) target = $region16
      $region15: #{tpu_custom_call.1} parent=5 // pred_region
        // Predicated region
        $region17: #{tpu_custom_call.1} parent=15 // pred_check
          %p114 = pneg %p37
        $region18: #{tpu_custom_call.1} parent=15 // pred_check_branch
          %116 = sbr.rel (%p114) target = $region20
        $region19: #{tpu_custom_call.1} parent=15 // pred_region
          %s117 = sand.u32 %s27, 1
          %s118 = scalar_lea.sflag [#allocation3], %s117
          %s119 = sand.u32 %s27, 1
          %s120 = smul.addr %s119, 17
          %s121 = scalar_lea.vmem [#allocation2], %s120
          %s122 = smul.u32 17, %s17
          %s124 = ssub.s32 272, 272
          %125 = vsyncadd %s118, %s124
          %s126 = smul.addr %s122, 16
          %s127 = scalar_lea.hbm %s0, %s126
          %s129 = sshll.u32 %s121, 4
          %s130 = int_to_ptr.vmem [resolvable:$true] %s129
          %132 = dma.hbm_to_vmem [thread:$0]  %s127, 272, %s130, %s118
        $region20: #{tpu_custom_call.1} parent=15 // pred_fallthru
          _
        // Predicated region
        $region21: #{tpu_custom_call.1} parent=15 // pred_check
          %p133 = pneg %p63
        $region22: #{tpu_custom_call.1} parent=15 // pred_check_branch
          %135 = sbr.rel (%p133) target = $region24
        $region23: #{tpu_custom_call.1} parent=15 // pred_region
          %s136 = sand.u32 %s53, 1
          %s137 = scalar_lea.sflag [#allocation6], %s136
          %s138 = sand.u32 %s53, 1
          %s139 = smul.addr %s138, 1224
          %s140 = scalar_lea.vmem [#allocation5], %s139
          %s141 = smul.u32 17, %s17
          %s143 = ssub.s32 19584, 19584
          %144 = vsyncadd %s137, %s143
          %s145 = smul.addr %s141, 128
          %s146 = scalar_lea.hbm %s1, %s145
          %s147 = sshll.u32 %s140, 4
          %s148 = int_to_ptr.vmem [resolvable:$true] %s147
          %153 = dma.hbm_to_vmem [thread:$0]  %s146, 19584, %s148, %s137, 4352, 2176, 136
        $region24: #{tpu_custom_call.1} parent=15 // pred_fallthru
          _
      $region16: #{tpu_custom_call.1} parent=5 // pred_fallthru
        _
      %p154 = scmp.le.s32.totalorder 1, %s17
      %p155 = scmp.lt.s32.totalorder %s17, 3
      %p156 = pnand %p154, %p155
      %p157 = pneg %p156
      // Predicated region
      $region25: #{tpu_custom_call.1} parent=5 // pred_check
        _
      $region26: #{tpu_custom_call.1} parent=5 // pred_check_branch
        %159 = sbr.rel (%p156) target = $region28
      $region27: #{tpu_custom_call.1} parent=5 // pred_region
        %s160 = ssub.s32 %s17, 1
        %s161 = sand.u32 %s30, 1
        %s162 = scalar_lea.sflag [#allocation3], %s161
        %s163 = sand.u32 %s30, 1
        %s164 = smul.addr %s163, 17
        %s165 = scalar_lea.vmem [#allocation2], %s164
        // Predicated region
        $region29: #{tpu_custom_call.1} parent=27 // pred_check
          %p166 = pneg %p43
        $region30: #{tpu_custom_call.1} parent=27 // pred_check_branch
          %168 = sbr.rel (%p166) target = $region32
        $region31: #{tpu_custom_call.1} parent=27 // pred_region
          %169 = dma.done %s162, 272
        $region32: #{tpu_custom_call.1} parent=27 // pred_fallthru
          _
        %s170 = sand.u32 %s56, 1
        %s171 = scalar_lea.sflag [#allocation6], %s170
        %s172 = sand.u32 %s56, 1
        %s173 = smul.addr %s172, 1224
        %s174 = scalar_lea.vmem [#allocation5], %s173
        // Predicated region
        $region33: #{tpu_custom_call.1} parent=27 // pred_check
          %p175 = pneg %p69
        $region34: #{tpu_custom_call.1} parent=27 // pred_check_branch
          %177 = sbr.rel (%p175) target = $region36
        $region35: #{tpu_custom_call.1} parent=27 // pred_region
          %178 = dma.done %s171, 19584
        $region36: #{tpu_custom_call.1} parent=27 // pred_fallthru
          _
        %s179 = sand.u32 %s30, 1
        %s180 = scalar_lea.sflag [#allocation3], %s179
        %s181 = sand.u32 %s30, 1
        %s182 = smul.addr %s181, 17
        %s183 = scalar_lea.vmem [#allocation2], %s182
        %p184 = pneg %p43
        %p185 = pneg %p40
        %s186 = sand.u32 %s56, 1
        %s187 = scalar_lea.sflag [#allocation6], %s186
        %s188 = sand.u32 %s56, 1
        %s189 = smul.addr %s188, 1224
        %s190 = scalar_lea.vmem [#allocation5], %s189
        %p191 = pneg %p69
        %p192 = pneg %p66
        %p193 = pneg %p95
        %p194 = pneg %p92
        %s195 = sand.u32 %s82, 1
        %s196 = scalar_lea.sflag [#allocation4], %s195
        %s197 = sand.u32 %s82, 1
        %s198 = smul.addr %s197, 17
        %s199 = scalar_lea.vmem [#allocation7], %s198
        %s200 = smul.u32 17, %s22
        %s201 = smul.u32 17, %s22
        %s202 = smul.u32 17, %s22
        %v203 = vld [vmem:[%s165] sm:$0xf]
        %v205 = vlaneseq
        %v206 = vshrl.u32 %v205, 7
        %v207 = vsub.s32 0, %v206
        %v208 = vrot.slane %v203, %v207
        %v209 = vlaneseq
        %v210 = vshrl.u32 %v209, 7
        %v211 = vsub.s32 1, %v210
        %v212 = vrot.slane %v203, %v211
        %v213 = vlaneseq
        %v214 = vshrl.u32 %v213, 7
        %v215 = vsub.s32 2, %v214
        %v216 = vrot.slane %v203, %v215
        %v217 = vlaneseq
        %v218 = vshrl.u32 %v217, 7
        %v219 = vsub.s32 3, %v218
        %v220 = vrot.slane %v203, %v219
        %v225 = vld [vmem:[%s174] sm:$0xff]
        %v226 = vld [vmem:[%s174 + $0x8] sm:$0xff]
        %v227 = vld [vmem:[%s174 + $0x10] sm:$0xff]
        %v228 = vld [vmem:[%s174 + $0x18] sm:$0xff]
        %v229 = vsub.f32 %v208, %v225
        %v230 = vsub.f32 %v212, %v226
        %v231 = vsub.f32 %v216, %v227
        %v232 = vsub.f32 %v220, %v228
        %v233 = vand.u32 2147483647, %v229
        %v234 = vand.u32 2147483647, %v230
        %v235 = vand.u32 2147483647, %v231
        %v236 = vand.u32 2147483647, %v232
        %v237 = vld [vmem:[%s174 + $0x88] sm:$0xff]
        %v238 = vld [vmem:[%s174 + $0x90] sm:$0xff]
        %v239 = vld [vmem:[%s174 + $0x98] sm:$0xff]
        %v240 = vld [vmem:[%s174 + $0xa0] sm:$0xff]
        %v241 = vsub.f32 %v208, %v237
        %v242 = vsub.f32 %v212, %v238
        %v243 = vsub.f32 %v216, %v239
        %v244 = vsub.f32 %v220, %v240
        %v245 = vand.u32 2147483647, %v241
        %v246 = vand.u32 2147483647, %v242
        %v247 = vand.u32 2147483647, %v243
        %v248 = vand.u32 2147483647, %v244
        %v249 = vadd.f32 %v233, %v245
        %v250 = vadd.f32 %v234, %v246
        %v251 = vadd.f32 %v235, %v247
        %v252 = vadd.f32 %v236, %v248
        %v253 = vld [vmem:[%s174 + $0x110] sm:$0xff]
        %v254 = vld [vmem:[%s174 + $0x118] sm:$0xff]
        %v255 = vld [vmem:[%s174 + $0x120] sm:$0xff]
        %v256 = vld [vmem:[%s174 + $0x128] sm:$0xff]
        %v257 = vsub.f32 %v208, %v253
        %v258 = vsub.f32 %v212, %v254
        %v259 = vsub.f32 %v216, %v255
        %v260 = vsub.f32 %v220, %v256
        %v261 = vand.u32 2147483647, %v257
        %v262 = vand.u32 2147483647, %v258
        %v263 = vand.u32 2147483647, %v259
        %v264 = vand.u32 2147483647, %v260
        %v265 = vadd.f32 %v249, %v261
        %v266 = vadd.f32 %v250, %v262
        %v267 = vadd.f32 %v251, %v263
        %v268 = vadd.f32 %v252, %v264
        %v269 = vld [vmem:[%s174 + $0x198] sm:$0xff]
        %v270 = vld [vmem:[%s174 + $0x1a0] sm:$0xff]
        %v271 = vld [vmem:[%s174 + $0x1a8] sm:$0xff]
        %v272 = vld [vmem:[%s174 + $0x1b0] sm:$0xff]
        %v273 = vsub.f32 %v208, %v269
        %v274 = vsub.f32 %v212, %v270
        %v275 = vsub.f32 %v216, %v271
        %v276 = vsub.f32 %v220, %v272
        %v277 = vand.u32 2147483647, %v273
        %v278 = vand.u32 2147483647, %v274
        %v279 = vand.u32 2147483647, %v275
        %v280 = vand.u32 2147483647, %v276
        %v281 = vadd.f32 %v265, %v277
        %v282 = vadd.f32 %v266, %v278
        %v283 = vadd.f32 %v267, %v279
        %v284 = vadd.f32 %v268, %v280
        %v285 = vld [vmem:[%s174 + $0x220] sm:$0xff]
        %v286 = vld [vmem:[%s174 + $0x228] sm:$0xff]
        %v287 = vld [vmem:[%s174 + $0x230] sm:$0xff]
        %v288 = vld [vmem:[%s174 + $0x238] sm:$0xff]
        %v289 = vsub.f32 %v208, %v285
        %v290 = vsub.f32 %v212, %v286
        %v291 = vsub.f32 %v216, %v287
        %v292 = vsub.f32 %v220, %v288
        %v293 = vand.u32 2147483647, %v289
        %v294 = vand.u32 2147483647, %v290
        %v295 = vand.u32 2147483647, %v291
        %v296 = vand.u32 2147483647, %v292
        %v297 = vadd.f32 %v281, %v293
        %v298 = vadd.f32 %v282, %v294
        %v299 = vadd.f32 %v283, %v295
        %v300 = vadd.f32 %v284, %v296
        %v301 = vld [vmem:[%s174 + $0x2a8] sm:$0xff]
        %v302 = vld [vmem:[%s174 + $0x2b0] sm:$0xff]
        %v303 = vld [vmem:[%s174 + $0x2b8] sm:$0xff]
        %v304 = vld [vmem:[%s174 + $0x2c0] sm:$0xff]
        %v305 = vsub.f32 %v208, %v301
        %v306 = vsub.f32 %v212, %v302
        %v307 = vsub.f32 %v216, %v303
        %v308 = vsub.f32 %v220, %v304
        %v309 = vand.u32 2147483647, %v305
        %v310 = vand.u32 2147483647, %v306
        %v311 = vand.u32 2147483647, %v307
        %v312 = vand.u32 2147483647, %v308
        %v313 = vadd.f32 %v297, %v309
        %v314 = vadd.f32 %v298, %v310
        %v315 = vadd.f32 %v299, %v311
        %v316 = vadd.f32 %v300, %v312
        %v317 = vld [vmem:[%s174 + $0x330] sm:$0xff]
        %v318 = vld [vmem:[%s174 + $0x338] sm:$0xff]
        %v319 = vld [vmem:[%s174 + $0x340] sm:$0xff]
        %v320 = vld [vmem:[%s174 + $0x348] sm:$0xff]
        %v321 = vsub.f32 %v208, %v317
        %v322 = vsub.f32 %v212, %v318
        %v323 = vsub.f32 %v216, %v319
        %v324 = vsub.f32 %v220, %v320
        %v325 = vand.u32 2147483647, %v321
        %v326 = vand.u32 2147483647, %v322
        %v327 = vand.u32 2147483647, %v323
        %v328 = vand.u32 2147483647, %v324
        %v329 = vadd.f32 %v313, %v325
        %v330 = vadd.f32 %v314, %v326
        %v331 = vadd.f32 %v315, %v327
        %v332 = vadd.f32 %v316, %v328
        %v333 = vld [vmem:[%s174 + $0x3b8] sm:$0xff]
        %v334 = vld [vmem:[%s174 + $0x3c0] sm:$0xff]
        %v335 = vld [vmem:[%s174 + $0x3c8] sm:$0xff]
        %v336 = vld [vmem:[%s174 + $0x3d0] sm:$0xff]
        %v337 = vsub.f32 %v208, %v333
        %v338 = vsub.f32 %v212, %v334
        %v339 = vsub.f32 %v216, %v335
        %v340 = vsub.f32 %v220, %v336
        %v341 = vand.u32 2147483647, %v337
        %v342 = vand.u32 2147483647, %v338
        %v343 = vand.u32 2147483647, %v339
        %v344 = vand.u32 2147483647, %v340
        %v345 = vadd.f32 %v329, %v341
        %v346 = vadd.f32 %v330, %v342
        %v347 = vadd.f32 %v331, %v343
        %v348 = vadd.f32 %v332, %v344
        %v349 = vrot.slane %v345, 4
        %v350 = vadd.f32 %v345, %v349
        %v351 = vrot.slane %v350, 2
        %v352 = vadd.f32 %v350, %v351
        %v353 = vrot.slane %v352, 1
        %v354 = vadd.f32 %v352, %v353
        %v355 = vrot.slane %v346, 4
        %v356 = vadd.f32 %v346, %v355
        %v357 = vrot.slane %v356, 2
        %v358 = vadd.f32 %v356, %v357
        %v359 = vrot.slane %v358, 1
        %v360 = vadd.f32 %v358, %v359
        %v361 = vrot.slane %v347, 4
        %v362 = vadd.f32 %v347, %v361
        %v363 = vrot.slane %v362, 2
        %v364 = vadd.f32 %v362, %v363
        %v365 = vrot.slane %v364, 1
        %v366 = vadd.f32 %v364, %v365
        %v367 = vrot.slane %v348, 4
        %v368 = vadd.f32 %v348, %v367
        %v369 = vrot.slane %v368, 2
        %v370 = vadd.f32 %v368, %v369
        %v371 = vrot.slane %v370, 1
        %v372 = vadd.f32 %v370, %v371
        %s373 = scalar_lea.vmem %s174, 1088 [#allocation5]
        %v374 = vld [vmem:[%s373] ss:$8 sm:$0xf]
        %v375 = vsub.f32 %v203, %v374
        %v376 = vand.u32 2147483647, %v375
        %v378 = vlaneseq
        %v379 = vshrl.u32 %v378, 7
        %v380 = vsub.s32 0, %v379
        %v381 = vrot.slane %v376, %v380
        %v382 = vlaneseq
        %v383 = vshrl.u32 %v382, 7
        %v384 = vsub.s32 1, %v383
        %v385 = vrot.slane %v376, %v384
        %v386 = vlaneseq
        %v387 = vshrl.u32 %v386, 7
        %v388 = vsub.s32 2, %v387
        %v389 = vrot.slane %v376, %v388
        %v390 = vlaneseq
        %v391 = vshrl.u32 %v390, 7
        %v392 = vsub.s32 3, %v391
        %v393 = vrot.slane %v376, %v392
        %v398 = vadd.f32 %v354, %v381
        %v399 = vadd.f32 %v360, %v385
        %v400 = vadd.f32 %v366, %v389
        %v401 = vadd.f32 %v372, %v393
        %s402 = scalar_lea.vmem %s174, 1089 [#allocation5]
        %v403 = vld [vmem:[%s402] ss:$8 sm:$0xf]
        %v404 = vsub.f32 %v203, %v403
        %v405 = vand.u32 2147483647, %v404
        %v407 = vlaneseq
        %v408 = vshrl.u32 %v407, 7
        %v409 = vsub.s32 0, %v408
        %v410 = vrot.slane %v405, %v409
        %v411 = vlaneseq
        %v412 = vshrl.u32 %v411, 7
        %v413 = vsub.s32 1, %v412
        %v414 = vrot.slane %v405, %v413
        %v415 = vlaneseq
        %v416 = vshrl.u32 %v415, 7
        %v417 = vsub.s32 2, %v416
        %v418 = vrot.slane %v405, %v417
        %v419 = vlaneseq
        %v420 = vshrl.u32 %v419, 7
        %v421 = vsub.s32 3, %v420
        %v422 = vrot.slane %v405, %v421
        %v427 = vadd.f32 %v398, %v410
        %v428 = vadd.f32 %v399, %v414
        %v429 = vadd.f32 %v400, %v418
        %v430 = vadd.f32 %v401, %v422
        %v431 = vmul.f32 %v427, 0.5
        %v432 = vmul.f32 %v428, 0.5
        %v433 = vmul.f32 %v429, 0.5
        %v434 = vmul.f32 %v430, 0.5
        %v435 = vmul.f32 %v427, %v427
        %v436 = vmul.f32 %v428, %v428
        %v437 = vmul.f32 %v429, %v429
        %v438 = vmul.f32 %v430, %v430
        %v439 = vmul.f32 %v435, %v427
        %v440 = vmul.f32 %v436, %v428
        %v441 = vmul.f32 %v437, %v429
        %v442 = vmul.f32 %v438, %v430
        %v443 = vmul.f32 %v439, 0.044715
        %v444 = vmul.f32 %v440, 0.044715
        %v445 = vmul.f32 %v441, 0.044715
        %v446 = vmul.f32 %v442, 0.044715
        %v447 = vadd.f32 %v427, %v443
        %v448 = vadd.f32 %v428, %v444
        %v449 = vadd.f32 %v429, %v445
        %v450 = vadd.f32 %v430, %v446
        %v451 = vmul.f32 %v447, 0.7978846
        %v452 = vmul.f32 %v448, 0.7978846
        %v453 = vmul.f32 %v449, 0.7978846
        %v454 = vmul.f32 %v450, 0.7978846
        %v455 = vtanh.pop %v451
        %v456 = vtanh.pop %v452
        %v457 = vtanh.pop %v453
        %v458 = vtanh.pop %v454
        %v459 = vadd.f32 %v455, 1.0
        %v460 = vadd.f32 %v456, 1.0
        %v461 = vadd.f32 %v457, 1.0
        %v462 = vadd.f32 %v458, 1.0
        %v463 = vmul.f32 %v431, %v459
        %v464 = vmul.f32 %v432, %v460
        %v465 = vmul.f32 %v433, %v461
        %v466 = vmul.f32 %v434, %v462
        %v471 = vcombine.low %v463, %v464
        %v472 = vcombine.low %v465, %v466
        %v474 = vunpack.c.l.s4 1966171168
        %v475 = vunpack.c.0.s8 %v474
        %v476 = vlaneseq
        %v477 = vshrl.u32 %v476, 7
        %v478 = vsub.s32 %v475, %v477
        %v479 = vrot.slane %v471, %v478
        %v481 = vunpack.c.l.s4 1966171168
        %v482 = vunpack.c.0.s8 %v481
        %v483 = vlaneseq
        %v484 = vshrl.u32 %v483, 7
        %v485 = vsub.s32 %v482, %v484
        %v486 = vrot.slane %v472, %v485
        %v487 = vcombine.low %v479, %v486
        %v489 = vunpack.c.l.s4 1966171168
        %v490 = vunpack.c.0.s8 %v489
        %v491 = vlaneseq
        %v492 = vshrl.u32 %v491, 7
        %v493 = vsub.s32 %v490, %v492
        %v494 = vrot.slane %v487, %v493
        %v496 = vlaneseq
        %vm497 = vcmp.ge.s32.totalorder %v496, 0
        %vm498 = vcmp.lt.s32.totalorder %v496, 512
        %vm499 = vmand %vm497, %vm498
        %500 = vst.msk [vmem:[%s199] sm:$0xf] %vm499, %v494
        %v501 = vld [vmem:[%s165 + $0x4] sm:$0xf]
        %v503 = vlaneseq
        %v504 = vshrl.u32 %v503, 7
        %v505 = vsub.s32 0, %v504
        %v506 = vrot.slane %v501, %v505
        %v507 = vlaneseq
        %v508 = vshrl.u32 %v507, 7
        %v509 = vsub.s32 1, %v508
        %v510 = vrot.slane %v501, %v509
        %v511 = vlaneseq
        %v512 = vshrl.u32 %v511, 7
        %v513 = vsub.s32 2, %v512
        %v514 = vrot.slane %v501, %v513
        %v515 = vlaneseq
        %v516 = vshrl.u32 %v515, 7
        %v517 = vsub.s32 3, %v516
        %v518 = vrot.slane %v501, %v517
        %v523 = vld [vmem:[%s174 + $0x20] sm:$0xff]
        %v524 = vld [vmem:[%s174 + $0x28] sm:$0xff]
        %v525 = vld [vmem:[%s174 + $0x30] sm:$0xff]
        %v526 = vld [vmem:[%s174 + $0x38] sm:$0xff]
        %v527 = vsub.f32 %v506, %v523
        %v528 = vsub.f32 %v510, %v524
        %v529 = vsub.f32 %v514, %v525
        %v530 = vsub.f32 %v518, %v526
        %v531 = vand.u32 2147483647, %v527
        %v532 = vand.u32 2147483647, %v528
        %v533 = vand.u32 2147483647, %v529
        %v534 = vand.u32 2147483647, %v530
        %v535 = vld [vmem:[%s174 + $0xa8] sm:$0xff]
        %v536 = vld [vmem:[%s174 + $0xb0] sm:$0xff]
        %v537 = vld [vmem:[%s174 + $0xb8] sm:$0xff]
        %v538 = vld [vmem:[%s174 + $0xc0] sm:$0xff]
        %v539 = vsub.f32 %v506, %v535
        %v540 = vsub.f32 %v510, %v536
        %v541 = vsub.f32 %v514, %v537
        %v542 = vsub.f32 %v518, %v538
        %v543 = vand.u32 2147483647, %v539
        %v544 = vand.u32 2147483647, %v540
        %v545 = vand.u32 2147483647, %v541
        %v546 = vand.u32 2147483647, %v542
        %v547 = vadd.f32 %v531, %v543
        %v548 = vadd.f32 %v532, %v544
        %v549 = vadd.f32 %v533, %v545
        %v550 = vadd.f32 %v534, %v546
        %v551 = vld [vmem:[%s174 + $0x130] sm:$0xff]
        %v552 = vld [vmem:[%s174 + $0x138] sm:$0xff]
        %v553 = vld [vmem:[%s174 + $0x140] sm:$0xff]
        %v554 = vld [vmem:[%s174 + $0x148] sm:$0xff]
        %v555 = vsub.f32 %v506, %v551
        %v556 = vsub.f32 %v510, %v552
        %v557 = vsub.f32 %v514, %v553
        %v558 = vsub.f32 %v518, %v554
        %v559 = vand.u32 2147483647, %v555
        %v560 = vand.u32 2147483647, %v556
        %v561 = vand.u32 2147483647, %v557
        %v562 = vand.u32 2147483647, %v558
        %v563 = vadd.f32 %v547, %v559
        %v564 = vadd.f32 %v548, %v560
        %v565 = vadd.f32 %v549, %v561
        %v566 = vadd.f32 %v550, %v562
        %v567 = vld [vmem:[%s174 + $0x1b8] sm:$0xff]
        %v568 = vld [vmem:[%s174 + $0x1c0] sm:$0xff]
        %v569 = vld [vmem:[%s174 + $0x1c8] sm:$0xff]
        %v570 = vld [vmem:[%s174 + $0x1d0] sm:$0xff]
        %v571 = vsub.f32 %v506, %v567
        %v572 = vsub.f32 %v510, %v568
        %v573 = vsub.f32 %v514, %v569
        %v574 = vsub.f32 %v518, %v570
        %v575 = vand.u32 2147483647, %v571
        %v576 = vand.u32 2147483647, %v572
        %v577 = vand.u32 2147483647, %v573
        %v578 = vand.u32 2147483647, %v574
        %v579 = vadd.f32 %v563, %v575
        %v580 = vadd.f32 %v564, %v576
        %v581 = vadd.f32 %v565, %v577
        %v582 = vadd.f32 %v566, %v578
        %v583 = vld [vmem:[%s174 + $0x240] sm:$0xff]
        %v584 = vld [vmem:[%s174 + $0x248] sm:$0xff]
        %v585 = vld [vmem:[%s174 + $0x250] sm:$0xff]
        %v586 = vld [vmem:[%s174 + $0x258] sm:$0xff]
        %v587 = vsub.f32 %v506, %v583
        %v588 = vsub.f32 %v510, %v584
        %v589 = vsub.f32 %v514, %v585
        %v590 = vsub.f32 %v518, %v586
        %v591 = vand.u32 2147483647, %v587
        %v592 = vand.u32 2147483647, %v588
        %v593 = vand.u32 2147483647, %v589
        %v594 = vand.u32 2147483647, %v590
        %v595 = vadd.f32 %v579, %v591
        %v596 = vadd.f32 %v580, %v592
        %v597 = vadd.f32 %v581, %v593
        %v598 = vadd.f32 %v582, %v594
        %v599 = vld [vmem:[%s174 + $0x2c8] sm:$0xff]
        %v600 = vld [vmem:[%s174 + $0x2d0] sm:$0xff]
        %v601 = vld [vmem:[%s174 + $0x2d8] sm:$0xff]
        %v602 = vld [vmem:[%s174 + $0x2e0] sm:$0xff]
        %v603 = vsub.f32 %v506, %v599
        %v604 = vsub.f32 %v510, %v600
        %v605 = vsub.f32 %v514, %v601
        %v606 = vsub.f32 %v518, %v602
        %v607 = vand.u32 2147483647, %v603
        %v608 = vand.u32 2147483647, %v604
        %v609 = vand.u32 2147483647, %v605
        %v610 = vand.u32 2147483647, %v606
        %v611 = vadd.f32 %v595, %v607
        %v612 = vadd.f32 %v596, %v608
        %v613 = vadd.f32 %v597, %v609
        %v614 = vadd.f32 %v598, %v610
        %v615 = vld [vmem:[%s174 + $0x350] sm:$0xff]
        %v616 = vld [vmem:[%s174 + $0x358] sm:$0xff]
        %v617 = vld [vmem:[%s174 + $0x360] sm:$0xff]
        %v618 = vld [vmem:[%s174 + $0x368] sm:$0xff]
        %v619 = vsub.f32 %v506, %v615
        %v620 = vsub.f32 %v510, %v616
        %v621 = vsub.f32 %v514, %v617
        %v622 = vsub.f32 %v518, %v618
        %v623 = vand.u32 2147483647, %v619
        %v624 = vand.u32 2147483647, %v620
        %v625 = vand.u32 2147483647, %v621
        %v626 = vand.u32 2147483647, %v622
        %v627 = vadd.f32 %v611, %v623
        %v628 = vadd.f32 %v612, %v624
        %v629 = vadd.f32 %v613, %v625
        %v630 = vadd.f32 %v614, %v626
        %v631 = vld [vmem:[%s174 + $0x3d8] sm:$0xff]
        %v632 = vld [vmem:[%s174 + $0x3e0] sm:$0xff]
        %v633 = vld [vmem:[%s174 + $0x3e8] sm:$0xff]
        %v634 = vld [vmem:[%s174 + $0x3f0] sm:$0xff]
        %v635 = vsub.f32 %v506, %v631
        %v636 = vsub.f32 %v510, %v632
        %v637 = vsub.f32 %v514, %v633
        %v638 = vsub.f32 %v518, %v634
        %v639 = vand.u32 2147483647, %v635
        %v640 = vand.u32 2147483647, %v636
        %v641 = vand.u32 2147483647, %v637
        %v642 = vand.u32 2147483647, %v638
        %v643 = vadd.f32 %v627, %v639
        %v644 = vadd.f32 %v628, %v640
        %v645 = vadd.f32 %v629, %v641
        %v646 = vadd.f32 %v630, %v642
        %v647 = vrot.slane %v643, 4
        %v648 = vadd.f32 %v643, %v647
        %v649 = vrot.slane %v648, 2
        %v650 = vadd.f32 %v648, %v649
        %v651 = vrot.slane %v650, 1
        %v652 = vadd.f32 %v650, %v651
        %v653 = vrot.slane %v644, 4
        %v654 = vadd.f32 %v644, %v653
        %v655 = vrot.slane %v654, 2
        %v656 = vadd.f32 %v654, %v655
        %v657 = vrot.slane %v656, 1
        %v658 = vadd.f32 %v656, %v657
        %v659 = vrot.slane %v645, 4
        %v660 = vadd.f32 %v645, %v659
        %v661 = vrot.slane %v660, 2
        %v662 = vadd.f32 %v660, %v661
        %v663 = vrot.slane %v662, 1
        %v664 = vadd.f32 %v662, %v663
        %v665 = vrot.slane %v646, 4
        %v666 = vadd.f32 %v646, %v665
        %v667 = vrot.slane %v666, 2
        %v668 = vadd.f32 %v666, %v667
        %v669 = vrot.slane %v668, 1
        %v670 = vadd.f32 %v668, %v669
        %s671 = scalar_lea.vmem %s174, 1120 [#allocation5]
        %v672 = vld [vmem:[%s671] ss:$8 sm:$0xf]
        %v673 = vsub.f32 %v501, %v672
        %v674 = vand.u32 2147483647, %v673
        %v676 = vlaneseq
        %v677 = vshrl.u32 %v676, 7
        %v678 = vsub.s32 0, %v677
        %v679 = vrot.slane %v674, %v678
        %v680 = vlaneseq
        %v681 = vshrl.u32 %v680, 7
        %v682 = vsub.s32 1, %v681
        %v683 = vrot.slane %v674, %v682
        %v684 = vlaneseq
        %v685 = vshrl.u32 %v684, 7
        %v686 = vsub.s32 2, %v685
        %v687 = vrot.slane %v674, %v686
        %v688 = vlaneseq
        %v689 = vshrl.u32 %v688, 7
        %v690 = vsub.s32 3, %v689
        %v691 = vrot.slane %v674, %v690
        %v696 = vadd.f32 %v652, %v679
        %v697 = vadd.f32 %v658, %v683
        %v698 = vadd.f32 %v664, %v687
        %v699 = vadd.f32 %v670, %v691
        %s700 = scalar_lea.vmem %s174, 1121 [#allocation5]
        %v701 = vld [vmem:[%s700] ss:$8 sm:$0xf]
        %v702 = vsub.f32 %v501, %v701
        %v703 = vand.u32 2147483647, %v702
        %v705 = vlaneseq
        %v706 = vshrl.u32 %v705, 7
        %v707 = vsub.s32 0, %v706
        %v708 = vrot.slane %v703, %v707
        %v709 = vlaneseq
        %v710 = vshrl.u32 %v709, 7
        %v711 = vsub.s32 1, %v710
        %v712 = vrot.slane %v703, %v711
        %v713 = vlaneseq
        %v714 = vshrl.u32 %v713, 7
        %v715 = vsub.s32 2, %v714
        %v716 = vrot.slane %v703, %v715
        %v717 = vlaneseq
        %v718 = vshrl.u32 %v717, 7
        %v719 = vsub.s32 3, %v718
        %v720 = vrot.slane %v703, %v719
        %v725 = vadd.f32 %v696, %v708
        %v726 = vadd.f32 %v697, %v712
        %v727 = vadd.f32 %v698, %v716
        %v728 = vadd.f32 %v699, %v720
        %v729 = vmul.f32 %v725, 0.5
        %v730 = vmul.f32 %v726, 0.5
        %v731 = vmul.f32 %v727, 0.5
        %v732 = vmul.f32 %v728, 0.5
        %v733 = vmul.f32 %v725, %v725
        %v734 = vmul.f32 %v726, %v726
        %v735 = vmul.f32 %v727, %v727
        %v736 = vmul.f32 %v728, %v728
        %v737 = vmul.f32 %v733, %v725
        %v738 = vmul.f32 %v734, %v726
        %v739 = vmul.f32 %v735, %v727
        %v740 = vmul.f32 %v736, %v728
        %v741 = vmul.f32 %v737, 0.044715
        %v742 = vmul.f32 %v738, 0.044715
        %v743 = vmul.f32 %v739, 0.044715
        %v744 = vmul.f32 %v740, 0.044715
        %v745 = vadd.f32 %v725, %v741
        %v746 = vadd.f32 %v726, %v742
        %v747 = vadd.f32 %v727, %v743
        %v748 = vadd.f32 %v728, %v744
        %v749 = vmul.f32 %v745, 0.7978846
        %v750 = vmul.f32 %v746, 0.7978846
        %v751 = vmul.f32 %v747, 0.7978846
        %v752 = vmul.f32 %v748, 0.7978846
        %v753 = vtanh.pop %v749
        %v754 = vtanh.pop %v750
        %v755 = vtanh.pop %v751
        %v756 = vtanh.pop %v752
        %v757 = vadd.f32 %v753, 1.0
        %v758 = vadd.f32 %v754, 1.0
        %v759 = vadd.f32 %v755, 1.0
        %v760 = vadd.f32 %v756, 1.0
        %v761 = vmul.f32 %v729, %v757
        %v762 = vmul.f32 %v730, %v758
        %v763 = vmul.f32 %v731, %v759
        %v764 = vmul.f32 %v732, %v760
        %v769 = vcombine.low %v761, %v762
        %v770 = vcombine.low %v763, %v764
        %v772 = vunpack.c.l.s4 1966171168
        %v773 = vunpack.c.0.s8 %v772
        %v774 = vlaneseq
        %v775 = vshrl.u32 %v774, 7
        %v776 = vsub.s32 %v773, %v775
        %v777 = vrot.slane %v769, %v776
        %v779 = vunpack.c.l.s4 1966171168
        %v780 = vunpack.c.0.s8 %v779
        %v781 = vlaneseq
        %v782 = vshrl.u32 %v781, 7
        %v783 = vsub.s32 %v780, %v782
        %v784 = vrot.slane %v770, %v783
        %v785 = vcombine.low %v777, %v784
        %v787 = vunpack.c.l.s4 1966171168
        %v788 = vunpack.c.0.s8 %v787
        %v789 = vlaneseq
        %v790 = vshrl.u32 %v789, 7
        %v791 = vsub.s32 %v788, %v790
        %v792 = vrot.slane %v785, %v791
        %794 = vst.msk [vmem:[%s199 + $0x4] sm:$0xf] %vm499, %v792
        %v795 = vld [vmem:[%s165 + $0x8] sm:$0xf]
        %v797 = vlaneseq
        %v798 = vshrl.u32 %v797, 7
        %v799 = vsub.s32 0, %v798
        %v800 = vrot.slane %v795, %v799
        %v801 = vlaneseq
        %v802 = vshrl.u32 %v801, 7
        %v803 = vsub.s32 1, %v802
        %v804 = vrot.slane %v795, %v803
        %v805 = vlaneseq
        %v806 = vshrl.u32 %v805, 7
        %v807 = vsub.s32 2, %v806
        %v808 = vrot.slane %v795, %v807
        %v809 = vlaneseq
        %v810 = vshrl.u32 %v809, 7
        %v811 = vsub.s32 3, %v810
        %v812 = vrot.slane %v795, %v811
        %v817 = vld [vmem:[%s174 + $0x40] sm:$0xff]
        %v818 = vld [vmem:[%s174 + $0x48] sm:$0xff]
        %v819 = vld [vmem:[%s174 + $0x50] sm:$0xff]
        %v820 = vld [vmem:[%s174 + $0x58] sm:$0xff]
        %v821 = vsub.f32 %v800, %v817
        %v822 = vsub.f32 %v804, %v818
        %v823 = vsub.f32 %v808, %v819
        %v824 = vsub.f32 %v812, %v820
        %v825 = vand.u32 2147483647, %v821
        %v826 = vand.u32 2147483647, %v822
        %v827 = vand.u32 2147483647, %v823
        %v828 = vand.u32 2147483647, %v824
        %v829 = vld [vmem:[%s174 + $0xc8] sm:$0xff]
        %v830 = vld [vmem:[%s174 + $0xd0] sm:$0xff]
        %v831 = vld [vmem:[%s174 + $0xd8] sm:$0xff]
        %v832 = vld [vmem:[%s174 + $0xe0] sm:$0xff]
        %v833 = vsub.f32 %v800, %v829
        %v834 = vsub.f32 %v804, %v830
        %v835 = vsub.f32 %v808, %v831
        %v836 = vsub.f32 %v812, %v832
        %v837 = vand.u32 2147483647, %v833
        %v838 = vand.u32 2147483647, %v834
        %v839 = vand.u32 2147483647, %v835
        %v840 = vand.u32 2147483647, %v836
        %v841 = vadd.f32 %v825, %v837
        %v842 = vadd.f32 %v826, %v838
        %v843 = vadd.f32 %v827, %v839
        %v844 = vadd.f32 %v828, %v840
        %v845 = vld [vmem:[%s174 + $0x150] sm:$0xff]
        %v846 = vld [vmem:[%s174 + $0x158] sm:$0xff]
        %v847 = vld [vmem:[%s174 + $0x160] sm:$0xff]
        %v848 = vld [vmem:[%s174 + $0x168] sm:$0xff]
        %v849 = vsub.f32 %v800, %v845
        %v850 = vsub.f32 %v804, %v846
        %v851 = vsub.f32 %v808, %v847
        %v852 = vsub.f32 %v812, %v848
        %v853 = vand.u32 2147483647, %v849
        %v854 = vand.u32 2147483647, %v850
        %v855 = vand.u32 2147483647, %v851
        %v856 = vand.u32 2147483647, %v852
        %v857 = vadd.f32 %v841, %v853
        %v858 = vadd.f32 %v842, %v854
        %v859 = vadd.f32 %v843, %v855
        %v860 = vadd.f32 %v844, %v856
        %v861 = vld [vmem:[%s174 + $0x1d8] sm:$0xff]
        %v862 = vld [vmem:[%s174 + $0x1e0] sm:$0xff]
        %v863 = vld [vmem:[%s174 + $0x1e8] sm:$0xff]
        %v864 = vld [vmem:[%s174 + $0x1f0] sm:$0xff]
        %v865 = vsub.f32 %v800, %v861
        %v866 = vsub.f32 %v804, %v862
        %v867 = vsub.f32 %v808, %v863
        %v868 = vsub.f32 %v812, %v864
        %v869 = vand.u32 2147483647, %v865
        %v870 = vand.u32 2147483647, %v866
        %v871 = vand.u32 2147483647, %v867
        %v872 = vand.u32 2147483647, %v868
        %v873 = vadd.f32 %v857, %v869
        %v874 = vadd.f32 %v858, %v870
        %v875 = vadd.f32 %v859, %v871
        %v876 = vadd.f32 %v860, %v872
        %v877 = vld [vmem:[%s174 + $0x260] sm:$0xff]
        %v878 = vld [vmem:[%s174 + $0x268] sm:$0xff]
        %v879 = vld [vmem:[%s174 + $0x270] sm:$0xff]
        %v880 = vld [vmem:[%s174 + $0x278] sm:$0xff]
        %v881 = vsub.f32 %v800, %v877
        %v882 = vsub.f32 %v804, %v878
        %v883 = vsub.f32 %v808, %v879
        %v884 = vsub.f32 %v812, %v880
        %v885 = vand.u32 2147483647, %v881
        %v886 = vand.u32 2147483647, %v882
        %v887 = vand.u32 2147483647, %v883
        %v888 = vand.u32 2147483647, %v884
        %v889 = vadd.f32 %v873, %v885
        %v890 = vadd.f32 %v874, %v886
        %v891 = vadd.f32 %v875, %v887
        %v892 = vadd.f32 %v876, %v888
        %v893 = vld [vmem:[%s174 + $0x2e8] sm:$0xff]
        %v894 = vld [vmem:[%s174 + $0x2f0] sm:$0xff]
        %v895 = vld [vmem:[%s174 + $0x2f8] sm:$0xff]
        %v896 = vld [vmem:[%s174 + $0x300] sm:$0xff]
        %v897 = vsub.f32 %v800, %v893
        %v898 = vsub.f32 %v804, %v894
        %v899 = vsub.f32 %v808, %v895
        %v900 = vsub.f32 %v812, %v896
        %v901 = vand.u32 2147483647, %v897
        %v902 = vand.u32 2147483647, %v898
        %v903 = vand.u32 2147483647, %v899
        %v904 = vand.u32 2147483647, %v900
        %v905 = vadd.f32 %v889, %v901
        %v906 = vadd.f32 %v890, %v902
        %v907 = vadd.f32 %v891, %v903
        %v908 = vadd.f32 %v892, %v904
        %v909 = vld [vmem:[%s174 + $0x370] sm:$0xff]
        %v910 = vld [vmem:[%s174 + $0x378] sm:$0xff]
        %v911 = vld [vmem:[%s174 + $0x380] sm:$0xff]
        %v912 = vld [vmem:[%s174 + $0x388] sm:$0xff]
        %v913 = vsub.f32 %v800, %v909
        %v914 = vsub.f32 %v804, %v910
        %v915 = vsub.f32 %v808, %v911
        %v916 = vsub.f32 %v812, %v912
        %v917 = vand.u32 2147483647, %v913
        %v918 = vand.u32 2147483647, %v914
        %v919 = vand.u32 2147483647, %v915
        %v920 = vand.u32 2147483647, %v916
        %v921 = vadd.f32 %v905, %v917
        %v922 = vadd.f32 %v906, %v918
        %v923 = vadd.f32 %v907, %v919
        %v924 = vadd.f32 %v908, %v920
        %v925 = vld [vmem:[%s174 + $0x3f8] sm:$0xff]
        %v926 = vld [vmem:[%s174 + $0x400] sm:$0xff]
        %v927 = vld [vmem:[%s174 + $0x408] sm:$0xff]
        %v928 = vld [vmem:[%s174 + $0x410] sm:$0xff]
        %v929 = vsub.f32 %v800, %v925
        %v930 = vsub.f32 %v804, %v926
        %v931 = vsub.f32 %v808, %v927
        %v932 = vsub.f32 %v812, %v928
        %v933 = vand.u32 2147483647, %v929
        %v934 = vand.u32 2147483647, %v930
        %v935 = vand.u32 2147483647, %v931
        %v936 = vand.u32 2147483647, %v932
        %v937 = vadd.f32 %v921, %v933
        %v938 = vadd.f32 %v922, %v934
        %v939 = vadd.f32 %v923, %v935
        %v940 = vadd.f32 %v924, %v936
        %v941 = vrot.slane %v937, 4
        %v942 = vadd.f32 %v937, %v941
        %v943 = vrot.slane %v942, 2
        %v944 = vadd.f32 %v942, %v943
        %v945 = vrot.slane %v944, 1
        %v946 = vadd.f32 %v944, %v945
        %v947 = vrot.slane %v938, 4
        %v948 = vadd.f32 %v938, %v947
        %v949 = vrot.slane %v948, 2
        %v950 = vadd.f32 %v948, %v949
        %v951 = vrot.slane %v950, 1
        %v952 = vadd.f32 %v950, %v951
        %v953 = vrot.slane %v939, 4
        %v954 = vadd.f32 %v939, %v953
        %v955 = vrot.slane %v954, 2
        %v956 = vadd.f32 %v954, %v955
        %v957 = vrot.slane %v956, 1
        %v958 = vadd.f32 %v956, %v957
        %v959 = vrot.slane %v940, 4
        %v960 = vadd.f32 %v940, %v959
        %v961 = vrot.slane %v960, 2
        %v962 = vadd.f32 %v960, %v961
        %v963 = vrot.slane %v962, 1
        %v964 = vadd.f32 %v962, %v963
        %s965 = scalar_lea.vmem %s174, 1152 [#allocation5]
        %v966 = vld [vmem:[%s965] ss:$8 sm:$0xf]
        %v967 = vsub.f32 %v795, %v966
        %v968 = vand.u32 2147483647, %v967
        %v970 = vlaneseq
        %v971 = vshrl.u32 %v970, 7
        %v972 = vsub.s32 0, %v971
        %v973 = vrot.slane %v968, %v972
        %v974 = vlaneseq
        %v975 = vshrl.u32 %v974, 7
        %v976 = vsub.s32 1, %v975
        %v977 = vrot.slane %v968, %v976
        %v978 = vlaneseq
        %v979 = vshrl.u32 %v978, 7
        %v980 = vsub.s32 2, %v979
        %v981 = vrot.slane %v968, %v980
        %v982 = vlaneseq
        %v983 = vshrl.u32 %v982, 7
        %v984 = vsub.s32 3, %v983
        %v985 = vrot.slane %v968, %v984
        %v990 = vadd.f32 %v946, %v973
        %v991 = vadd.f32 %v952, %v977
        %v992 = vadd.f32 %v958, %v981
        %v993 = vadd.f32 %v964, %v985
        %s994 = scalar_lea.vmem %s174, 1153 [#allocation5]
        %v995 = vld [vmem:[%s994] ss:$8 sm:$0xf]
        %v996 = vsub.f32 %v795, %v995
        %v997 = vand.u32 2147483647, %v996
        %v999 = vlaneseq
        %v1000 = vshrl.u32 %v999, 7
        %v1001 = vsub.s32 0, %v1000
        %v1002 = vrot.slane %v997, %v1001
        %v1003 = vlaneseq
        %v1004 = vshrl.u32 %v1003, 7
        %v1005 = vsub.s32 1, %v1004
        %v1006 = vrot.slane %v997, %v1005
        %v1007 = vlaneseq
        %v1008 = vshrl.u32 %v1007, 7
        %v1009 = vsub.s32 2, %v1008
        %v1010 = vrot.slane %v997, %v1009
        %v1011 = vlaneseq
        %v1012 = vshrl.u32 %v1011, 7
        %v1013 = vsub.s32 3, %v1012
        %v1014 = vrot.slane %v997, %v1013
        %v1019 = vadd.f32 %v990, %v1002
        %v1020 = vadd.f32 %v991, %v1006
        %v1021 = vadd.f32 %v992, %v1010
        %v1022 = vadd.f32 %v993, %v1014
        %v1023 = vmul.f32 %v1019, 0.5
        %v1024 = vmul.f32 %v1020, 0.5
        %v1025 = vmul.f32 %v1021, 0.5
        %v1026 = vmul.f32 %v1022, 0.5
        %v1027 = vmul.f32 %v1019, %v1019
        %v1028 = vmul.f32 %v1020, %v1020
        %v1029 = vmul.f32 %v1021, %v1021
        %v1030 = vmul.f32 %v1022, %v1022
        %v1031 = vmul.f32 %v1027, %v1019
        %v1032 = vmul.f32 %v1028, %v1020
        %v1033 = vmul.f32 %v1029, %v1021
        %v1034 = vmul.f32 %v1030, %v1022
        %v1035 = vmul.f32 %v1031, 0.044715
        %v1036 = vmul.f32 %v1032, 0.044715
        %v1037 = vmul.f32 %v1033, 0.044715
        %v1038 = vmul.f32 %v1034, 0.044715
        %v1039 = vadd.f32 %v1019, %v1035
        %v1040 = vadd.f32 %v1020, %v1036
        %v1041 = vadd.f32 %v1021, %v1037
        %v1042 = vadd.f32 %v1022, %v1038
        %v1043 = vmul.f32 %v1039, 0.7978846
        %v1044 = vmul.f32 %v1040, 0.7978846
        %v1045 = vmul.f32 %v1041, 0.7978846
        %v1046 = vmul.f32 %v1042, 0.7978846
        %v1047 = vtanh.pop %v1043
        %v1048 = vtanh.pop %v1044
        %v1049 = vtanh.pop %v1045
        %v1050 = vtanh.pop %v1046
        %v1051 = vadd.f32 %v1047, 1.0
        %v1052 = vadd.f32 %v1048, 1.0
        %v1053 = vadd.f32 %v1049, 1.0
        %v1054 = vadd.f32 %v1050, 1.0
        %v1055 = vmul.f32 %v1023, %v1051
        %v1056 = vmul.f32 %v1024, %v1052
        %v1057 = vmul.f32 %v1025, %v1053
        %v1058 = vmul.f32 %v1026, %v1054
        %v1063 = vcombine.low %v1055, %v1056
        %v1064 = vcombine.low %v1057, %v1058
        %v1066 = vunpack.c.l.s4 1966171168
        %v1067 = vunpack.c.0.s8 %v1066
        %v1068 = vlaneseq
        %v1069 = vshrl.u32 %v1068, 7
        %v1070 = vsub.s32 %v1067, %v1069
        %v1071 = vrot.slane %v1063, %v1070
        %v1073 = vunpack.c.l.s4 1966171168
        %v1074 = vunpack.c.0.s8 %v1073
        %v1075 = vlaneseq
        %v1076 = vshrl.u32 %v1075, 7
        %v1077 = vsub.s32 %v1074, %v1076
        %v1078 = vrot.slane %v1064, %v1077
        %v1079 = vcombine.low %v1071, %v1078
        %v1081 = vunpack.c.l.s4 1966171168
        %v1082 = vunpack.c.0.s8 %v1081
        %v1083 = vlaneseq
        %v1084 = vshrl.u32 %v1083, 7
        %v1085 = vsub.s32 %v1082, %v1084
        %v1086 = vrot.slane %v1079, %v1085
        %1088 = vst.msk [vmem:[%s199 + $0x8] sm:$0xf] %vm499, %v1086
        %v1089 = vld [vmem:[%s165 + $0xc] sm:$0xf]
        %v1091 = vlaneseq
        %v1092 = vshrl.u32 %v1091, 7
        %v1093 = vsub.s32 0, %v1092
        %v1094 = vrot.slane %v1089, %v1093
        %v1095 = vlaneseq
        %v1096 = vshrl.u32 %v1095, 7
        %v1097 = vsub.s32 1, %v1096
        %v1098 = vrot.slane %v1089, %v1097
        %v1099 = vlaneseq
        %v1100 = vshrl.u32 %v1099, 7
        %v1101 = vsub.s32 2, %v1100
        %v1102 = vrot.slane %v1089, %v1101
        %v1103 = vlaneseq
        %v1104 = vshrl.u32 %v1103, 7
        %v1105 = vsub.s32 3, %v1104
        %v1106 = vrot.slane %v1089, %v1105
        %v1111 = vld [vmem:[%s174 + $0x60] sm:$0xff]
        %v1112 = vld [vmem:[%s174 + $0x68] sm:$0xff]
        %v1113 = vld [vmem:[%s174 + $0x70] sm:$0xff]
        %v1114 = vld [vmem:[%s174 + $0x78] sm:$0xff]
        %v1115 = vsub.f32 %v1094, %v1111
        %v1116 = vsub.f32 %v1098, %v1112
        %v1117 = vsub.f32 %v1102, %v1113
        %v1118 = vsub.f32 %v1106, %v1114
        %v1119 = vand.u32 2147483647, %v1115
        %v1120 = vand.u32 2147483647, %v1116
        %v1121 = vand.u32 2147483647, %v1117
        %v1122 = vand.u32 2147483647, %v1118
        %v1123 = vld [vmem:[%s174 + $0xe8] sm:$0xff]
        %v1124 = vld [vmem:[%s174 + $0xf0] sm:$0xff]
        %v1125 = vld [vmem:[%s174 + $0xf8] sm:$0xff]
        %v1126 = vld [vmem:[%s174 + $0x100] sm:$0xff]
        %v1127 = vsub.f32 %v1094, %v1123
        %v1128 = vsub.f32 %v1098, %v1124
        %v1129 = vsub.f32 %v1102, %v1125
        %v1130 = vsub.f32 %v1106, %v1126
        %v1131 = vand.u32 2147483647, %v1127
        %v1132 = vand.u32 2147483647, %v1128
        %v1133 = vand.u32 2147483647, %v1129
        %v1134 = vand.u32 2147483647, %v1130
        %v1135 = vadd.f32 %v1119, %v1131
        %v1136 = vadd.f32 %v1120, %v1132
        %v1137 = vadd.f32 %v1121, %v1133
        %v1138 = vadd.f32 %v1122, %v1134
        %v1139 = vld [vmem:[%s174 + $0x170] sm:$0xff]
        %v1140 = vld [vmem:[%s174 + $0x178] sm:$0xff]
        %v1141 = vld [vmem:[%s174 + $0x180] sm:$0xff]
        %v1142 = vld [vmem:[%s174 + $0x188] sm:$0xff]
        %v1143 = vsub.f32 %v1094, %v1139
        %v1144 = vsub.f32 %v1098, %v1140
        %v1145 = vsub.f32 %v1102, %v1141
        %v1146 = vsub.f32 %v1106, %v1142
        %v1147 = vand.u32 2147483647, %v1143
        %v1148 = vand.u32 2147483647, %v1144
        %v1149 = vand.u32 2147483647, %v1145
        %v1150 = vand.u32 2147483647, %v1146
        %v1151 = vadd.f32 %v1135, %v1147
        %v1152 = vadd.f32 %v1136, %v1148
        %v1153 = vadd.f32 %v1137, %v1149
        %v1154 = vadd.f32 %v1138, %v1150
        %v1155 = vld [vmem:[%s174 + $0x1f8] sm:$0xff]
        %v1156 = vld [vmem:[%s174 + $0x200] sm:$0xff]
        %v1157 = vld [vmem:[%s174 + $0x208] sm:$0xff]
        %v1158 = vld [vmem:[%s174 + $0x210] sm:$0xff]
        %v1159 = vsub.f32 %v1094, %v1155
        %v1160 = vsub.f32 %v1098, %v1156
        %v1161 = vsub.f32 %v1102, %v1157
        %v1162 = vsub.f32 %v1106, %v1158
        %v1163 = vand.u32 2147483647, %v1159
        %v1164 = vand.u32 2147483647, %v1160
        %v1165 = vand.u32 2147483647, %v1161
        %v1166 = vand.u32 2147483647, %v1162
        %v1167 = vadd.f32 %v1151, %v1163
        %v1168 = vadd.f32 %v1152, %v1164
        %v1169 = vadd.f32 %v1153, %v1165
        %v1170 = vadd.f32 %v1154, %v1166
        %v1171 = vld [vmem:[%s174 + $0x280] sm:$0xff]
        %v1172 = vld [vmem:[%s174 + $0x288] sm:$0xff]
        %v1173 = vld [vmem:[%s174 + $0x290] sm:$0xff]
        %v1174 = vld [vmem:[%s174 + $0x298] sm:$0xff]
        %v1175 = vsub.f32 %v1094, %v1171
        %v1176 = vsub.f32 %v1098, %v1172
        %v1177 = vsub.f32 %v1102, %v1173
        %v1178 = vsub.f32 %v1106, %v1174
        %v1179 = vand.u32 2147483647, %v1175
        %v1180 = vand.u32 2147483647, %v1176
        %v1181 = vand.u32 2147483647, %v1177
        %v1182 = vand.u32 2147483647, %v1178
        %v1183 = vadd.f32 %v1167, %v1179
        %v1184 = vadd.f32 %v1168, %v1180
        %v1185 = vadd.f32 %v1169, %v1181
        %v1186 = vadd.f32 %v1170, %v1182
        %v1187 = vld [vmem:[%s174 + $0x308] sm:$0xff]
        %v1188 = vld [vmem:[%s174 + $0x310] sm:$0xff]
        %v1189 = vld [vmem:[%s174 + $0x318] sm:$0xff]
        %v1190 = vld [vmem:[%s174 + $0x320] sm:$0xff]
        %v1191 = vsub.f32 %v1094, %v1187
        %v1192 = vsub.f32 %v1098, %v1188
        %v1193 = vsub.f32 %v1102, %v1189
        %v1194 = vsub.f32 %v1106, %v1190
        %v1195 = vand.u32 2147483647, %v1191
        %v1196 = vand.u32 2147483647, %v1192
        %v1197 = vand.u32 2147483647, %v1193
        %v1198 = vand.u32 2147483647, %v1194
        %v1199 = vadd.f32 %v1183, %v1195
        %v1200 = vadd.f32 %v1184, %v1196
        %v1201 = vadd.f32 %v1185, %v1197
        %v1202 = vadd.f32 %v1186, %v1198
        %v1203 = vld [vmem:[%s174 + $0x390] sm:$0xff]
        %v1204 = vld [vmem:[%s174 + $0x398] sm:$0xff]
        %v1205 = vld [vmem:[%s174 + $0x3a0] sm:$0xff]
        %v1206 = vld [vmem:[%s174 + $0x3a8] sm:$0xff]
        %v1207 = vsub.f32 %v1094, %v1203
        %v1208 = vsub.f32 %v1098, %v1204
        %v1209 = vsub.f32 %v1102, %v1205
        %v1210 = vsub.f32 %v1106, %v1206
        %v1211 = vand.u32 2147483647, %v1207
        %v1212 = vand.u32 2147483647, %v1208
        %v1213 = vand.u32 2147483647, %v1209
        %v1214 = vand.u32 2147483647, %v1210
        %v1215 = vadd.f32 %v1199, %v1211
        %v1216 = vadd.f32 %v1200, %v1212
        %v1217 = vadd.f32 %v1201, %v1213
        %v1218 = vadd.f32 %v1202, %v1214
        %v1219 = vld [vmem:[%s174 + $0x418] sm:$0xff]
        %v1220 = vld [vmem:[%s174 + $0x420] sm:$0xff]
        %v1221 = vld [vmem:[%s174 + $0x428] sm:$0xff]
        %v1222 = vld [vmem:[%s174 + $0x430] sm:$0xff]
        %v1223 = vsub.f32 %v1094, %v1219
        %v1224 = vsub.f32 %v1098, %v1220
        %v1225 = vsub.f32 %v1102, %v1221
        %v1226 = vsub.f32 %v1106, %v1222
        %v1227 = vand.u32 2147483647, %v1223
        %v1228 = vand.u32 2147483647, %v1224
        %v1229 = vand.u32 2147483647, %v1225
        %v1230 = vand.u32 2147483647, %v1226
        %v1231 = vadd.f32 %v1215, %v1227
        %v1232 = vadd.f32 %v1216, %v1228
        %v1233 = vadd.f32 %v1217, %v1229
        %v1234 = vadd.f32 %v1218, %v1230
        %v1235 = vrot.slane %v1231, 4
        %v1236 = vadd.f32 %v1231, %v1235
        %v1237 = vrot.slane %v1236, 2
        %v1238 = vadd.f32 %v1236, %v1237
        %v1239 = vrot.slane %v1238, 1
        %v1240 = vadd.f32 %v1238, %v1239
        %v1241 = vrot.slane %v1232, 4
        %v1242 = vadd.f32 %v1232, %v1241
        %v1243 = vrot.slane %v1242, 2
        %v1244 = vadd.f32 %v1242, %v1243
        %v1245 = vrot.slane %v1244, 1
        %v1246 = vadd.f32 %v1244, %v1245
        %v1247 = vrot.slane %v1233, 4
        %v1248 = vadd.f32 %v1233, %v1247
        %v1249 = vrot.slane %v1248, 2
        %v1250 = vadd.f32 %v1248, %v1249
        %v1251 = vrot.slane %v1250, 1
        %v1252 = vadd.f32 %v1250, %v1251
        %v1253 = vrot.slane %v1234, 4
        %v1254 = vadd.f32 %v1234, %v1253
        %v1255 = vrot.slane %v1254, 2
        %v1256 = vadd.f32 %v1254, %v1255
        %v1257 = vrot.slane %v1256, 1
        %v1258 = vadd.f32 %v1256, %v1257
        %s1259 = scalar_lea.vmem %s174, 1184 [#allocation5]
        %v1260 = vld [vmem:[%s1259] ss:$8 sm:$0xf]
        %v1261 = vsub.f32 %v1089, %v1260
        %v1262 = vand.u32 2147483647, %v1261
        %v1264 = vlaneseq
        %v1265 = vshrl.u32 %v1264, 7
        %v1266 = vsub.s32 0, %v1265
        %v1267 = vrot.slane %v1262, %v1266
        %v1268 = vlaneseq
        %v1269 = vshrl.u32 %v1268, 7
        %v1270 = vsub.s32 1, %v1269
        %v1271 = vrot.slane %v1262, %v1270
        %v1272 = vlaneseq
        %v1273 = vshrl.u32 %v1272, 7
        %v1274 = vsub.s32 2, %v1273
        %v1275 = vrot.slane %v1262, %v1274
        %v1276 = vlaneseq
        %v1277 = vshrl.u32 %v1276, 7
        %v1278 = vsub.s32 3, %v1277
        %v1279 = vrot.slane %v1262, %v1278
        %v1284 = vadd.f32 %v1240, %v1267
        %v1285 = vadd.f32 %v1246, %v1271
        %v1286 = vadd.f32 %v1252, %v1275
        %v1287 = vadd.f32 %v1258, %v1279
        %s1288 = scalar_lea.vmem %s174, 1185 [#allocation5]
        %v1289 = vld [vmem:[%s1288] ss:$8 sm:$0xf]
        %v1290 = vsub.f32 %v1089, %v1289
        %v1291 = vand.u32 2147483647, %v1290
        %v1293 = vlaneseq
        %v1294 = vshrl.u32 %v1293, 7
        %v1295 = vsub.s32 0, %v1294
        %v1296 = vrot.slane %v1291, %v1295
        %v1297 = vlaneseq
        %v1298 = vshrl.u32 %v1297, 7
        %v1299 = vsub.s32 1, %v1298
        %v1300 = vrot.slane %v1291, %v1299
        %v1301 = vlaneseq
        %v1302 = vshrl.u32 %v1301, 7
        %v1303 = vsub.s32 2, %v1302
        %v1304 = vrot.slane %v1291, %v1303
        %v1305 = vlaneseq
        %v1306 = vshrl.u32 %v1305, 7
        %v1307 = vsub.s32 3, %v1306
        %v1308 = vrot.slane %v1291, %v1307
        %v1313 = vadd.f32 %v1284, %v1296
        %v1314 = vadd.f32 %v1285, %v1300
        %v1315 = vadd.f32 %v1286, %v1304
        %v1316 = vadd.f32 %v1287, %v1308
        %v1317 = vmul.f32 %v1313, 0.5
        %v1318 = vmul.f32 %v1314, 0.5
        %v1319 = vmul.f32 %v1315, 0.5
        %v1320 = vmul.f32 %v1316, 0.5
        %v1321 = vmul.f32 %v1313, %v1313
        %v1322 = vmul.f32 %v1314, %v1314
        %v1323 = vmul.f32 %v1315, %v1315
        %v1324 = vmul.f32 %v1316, %v1316
        %v1325 = vmul.f32 %v1321, %v1313
        %v1326 = vmul.f32 %v1322, %v1314
        %v1327 = vmul.f32 %v1323, %v1315
        %v1328 = vmul.f32 %v1324, %v1316
        %v1329 = vmul.f32 %v1325, 0.044715
        %v1330 = vmul.f32 %v1326, 0.044715
        %v1331 = vmul.f32 %v1327, 0.044715
        %v1332 = vmul.f32 %v1328, 0.044715
        %v1333 = vadd.f32 %v1313, %v1329
        %v1334 = vadd.f32 %v1314, %v1330
        %v1335 = vadd.f32 %v1315, %v1331
        %v1336 = vadd.f32 %v1316, %v1332
        %v1337 = vmul.f32 %v1333, 0.7978846
        %v1338 = vmul.f32 %v1334, 0.7978846
        %v1339 = vmul.f32 %v1335, 0.7978846
        %v1340 = vmul.f32 %v1336, 0.7978846
        %v1341 = vtanh.pop %v1337
        %v1342 = vtanh.pop %v1338
        %v1343 = vtanh.pop %v1339
        %v1344 = vtanh.pop %v1340
        %v1345 = vadd.f32 %v1341, 1.0
        %v1346 = vadd.f32 %v1342, 1.0
        %v1347 = vadd.f32 %v1343, 1.0
        %v1348 = vadd.f32 %v1344, 1.0
        %v1349 = vmul.f32 %v1317, %v1345
        %v1350 = vmul.f32 %v1318, %v1346
        %v1351 = vmul.f32 %v1319, %v1347
        %v1352 = vmul.f32 %v1320, %v1348
        %v1357 = vcombine.low %v1349, %v1350
        %v1358 = vcombine.low %v1351, %v1352
        %v1360 = vunpack.c.l.s4 1966171168
        %v1361 = vunpack.c.0.s8 %v1360
        %v1362 = vlaneseq
        %v1363 = vshrl.u32 %v1362, 7
        %v1364 = vsub.s32 %v1361, %v1363
        %v1365 = vrot.slane %v1357, %v1364
        %v1367 = vunpack.c.l.s4 1966171168
        %v1368 = vunpack.c.0.s8 %v1367
        %v1369 = vlaneseq
        %v1370 = vshrl.u32 %v1369, 7
        %v1371 = vsub.s32 %v1368, %v1370
        %v1372 = vrot.slane %v1358, %v1371
        %v1373 = vcombine.low %v1365, %v1372
        %v1375 = vunpack.c.l.s4 1966171168
        %v1376 = vunpack.c.0.s8 %v1375
        %v1377 = vlaneseq
        %v1378 = vshrl.u32 %v1377, 7
        %v1379 = vsub.s32 %v1376, %v1378
        %v1380 = vrot.slane %v1373, %v1379
        %1382 = vst.msk [vmem:[%s199 + $0xc] sm:$0xf] %vm499, %v1380
        %v1383 = vld [vmem:[%s165 + $0x10] sm:$0x1]
        %v1385 = vlaneseq
        %v1386 = vshrl.u32 %v1385, 7
        %v1387 = vsub.s32 0, %v1386
        %v1388 = vrot.slane %v1383, %v1387
        %v1390 = vld [vmem:[%s174 + $0x80] sm:$0xff]
        %v1391 = vsub.f32 %v1388, %v1390
        %v1392 = vand.u32 2147483647, %v1391
        %v1393 = vld [vmem:[%s174 + $0x108] sm:$0xff]
        %v1394 = vsub.f32 %v1388, %v1393
        %v1395 = vand.u32 2147483647, %v1394
        %v1396 = vadd.f32 %v1392, %v1395
        %v1397 = vld [vmem:[%s174 + $0x190] sm:$0xff]
        %v1398 = vsub.f32 %v1388, %v1397
        %v1399 = vand.u32 2147483647, %v1398
        %v1400 = vadd.f32 %v1396, %v1399
        %v1401 = vld [vmem:[%s174 + $0x218] sm:$0xff]
        %v1402 = vsub.f32 %v1388, %v1401
        %v1403 = vand.u32 2147483647, %v1402
        %v1404 = vadd.f32 %v1400, %v1403
        %v1405 = vld [vmem:[%s174 + $0x2a0] sm:$0xff]
        %v1406 = vsub.f32 %v1388, %v1405
        %v1407 = vand.u32 2147483647, %v1406
        %v1408 = vadd.f32 %v1404, %v1407
        %v1409 = vld [vmem:[%s174 + $0x328] sm:$0xff]
        %v1410 = vsub.f32 %v1388, %v1409
        %v1411 = vand.u32 2147483647, %v1410
        %v1412 = vadd.f32 %v1408, %v1411
        %v1413 = vld [vmem:[%s174 + $0x3b0] sm:$0xff]
        %v1414 = vsub.f32 %v1388, %v1413
        %v1415 = vand.u32 2147483647, %v1414
        %v1416 = vadd.f32 %v1412, %v1415
        %v1417 = vld [vmem:[%s174 + $0x438] sm:$0xff]
        %v1418 = vsub.f32 %v1388, %v1417
        %v1419 = vand.u32 2147483647, %v1418
        %v1420 = vadd.f32 %v1416, %v1419
        %v1421 = vrot.slane %v1420, 4
        %v1422 = vadd.f32 %v1420, %v1421
        %v1423 = vrot.slane %v1422, 2
        %v1424 = vadd.f32 %v1422, %v1423
        %v1425 = vrot.slane %v1424, 1
        %v1426 = vadd.f32 %v1424, %v1425
        %v1427 = vld [vmem:[%s174 + $0x4c0] ss:$0 sm:$0xff]
        %v1428 = vsub.f32 %v1383, %v1427
        %v1429 = vand.u32 2147483647, %v1428
        %v1430 = vadd.f32 %v1426, %v1429
        %v1431 = vld [vmem:[%s174 + $0x4c1] ss:$0 sm:$0xff]
        %v1432 = vsub.f32 %v1383, %v1431
        %v1433 = vand.u32 2147483647, %v1432
        %v1434 = vadd.f32 %v1430, %v1433
        %v1435 = vmul.f32 %v1434, 0.5
        %v1436 = vmul.f32 %v1434, %v1434
        %v1437 = vmul.f32 %v1436, %v1434
        %v1438 = vmul.f32 %v1437, 0.044715
        %v1439 = vadd.f32 %v1434, %v1438
        %v1440 = vmul.f32 %v1439, 0.7978846
        %v1441 = vtanh.pop %v1440
        %v1442 = vadd.f32 %v1441, 1.0
        %v1443 = vmul.f32 %v1435, %v1442
        %vm1444 = vcmp.lt.s32.totalorder %v496, 128
        %vm1445 = vmand %vm497, %vm1444
        %1446 = vst.msk [vmem:[%s199 + $0x10] sm:$0x1] %vm1445, %v1443
        %s1447 = sand.u32 %s82, 1
        %s1448 = scalar_lea.sflag [#allocation4], %s1447
        %s1449 = sand.u32 %s82, 1
        %s1450 = smul.addr %s1449, 17
        %s1451 = scalar_lea.vmem [#allocation7], %s1450
        // Predicated region
        $region37: #{tpu_custom_call.1} parent=27 // pred_check
          %p1452 = pneg %p92
        $region38: #{tpu_custom_call.1} parent=27 // pred_check_branch
          %1454 = sbr.rel (%p1452) target = $region40
        $region39: #{tpu_custom_call.1} parent=27 // pred_region
          %s1455 = smul.u32 17, %s22
          %s1457 = ssub.s32 272, 272
          %1458 = vsyncadd %s1448, %s1457
          %s1459 = smul.addr %s1455, 16
          %s1460 = scalar_lea.hbm %s2, %s1459
          %s1462 = sshll.u32 %s1451, 4
          %s1463 = int_to_ptr.vmem [resolvable:$true] %s1462
          %1465 = dma.vmem_to_hbm [thread:$0]  %s1463, 272, %s1460, %s1448
        $region40: #{tpu_custom_call.1} parent=27 // pred_fallthru
          _
      $region28: #{tpu_custom_call.1} parent=5 // pred_fallthru
        _
      %p1466 = scmp.le.s32.totalorder 2, %s17
      // Predicated region
      $region41: #{tpu_custom_call.1} parent=5 // pred_check
        %p1467 = pneg %p1466
      $region42: #{tpu_custom_call.1} parent=5 // pred_check_branch
        %1469 = sbr.rel (%p1467) target = $region44
      $region43: #{tpu_custom_call.1} parent=5 // pred_region
        %s1470 = ssub.s32 %s17, 2
        // Predicated region
        $region45: #{tpu_custom_call.1} parent=43 // pred_check
          %p1471 = pneg %p98
        $region46: #{tpu_custom_call.1} parent=43 // pred_check_branch
          %1473 = sbr.rel (%p1471) target = $region48
        $region47: #{tpu_custom_call.1} parent=43 // pred_region
          %s1474 = sand.u32 %s83, 1
          %s1475 = scalar_lea.sflag [#allocation4], %s1474
          %s1476 = sand.u32 %s83, 1
          %s1477 = smul.addr %s1476, 17
          %s1478 = scalar_lea.vmem [#allocation7], %s1477
          %1479 = dma.done %s1475, 272
        $region48: #{tpu_custom_call.1} parent=43 // pred_fallthru
          _
      $region44: #{tpu_custom_call.1} parent=5 // pred_fallthru
        _
    $region6: #{tpu_custom_call.1} parent=1 // loop_footer
      %s21 = sadd.s32 1, %s17
    $region7: #{tpu_custom_call.1} parent=1 // loop_footer_branch
      %16 = sbr.rel target = $region3
    $region8: #{tpu_custom_call.1} parent=1 // loop_exit
      _
    %1480 = vsyncpa [#allocation3], 1
    %s1481 = scalar_lea.sflag [#allocation3], 1
    %1482 = vsyncpa %s1481, 1
    %1483 = vsyncpa [#allocation6], 1
    %s1484 = scalar_lea.sflag [#allocation6], 1
    %1485 = vsyncpa %s1484, 1
    %1486 = vsyncpa [#allocation4], 1
    %s1487 = scalar_lea.sflag [#allocation4], 1
    %1488 = vsyncpa %s1487, 1

</llo_original>
